<compile_context>
chip_gen: v7x
topology: tpu7x:2x2x1
jax: 0.10.0
libtpu: 0.0.40
codegen_flags: <defaults>
</compile_context>

<pallas_src>
import functools

import jax
import jax.numpy as jnp
from jax import lax
from jax.experimental import pallas as pl
from jax.experimental.pallas import tpu as pltpu


def _mish(x):
    # mish(x) = x * tanh(softplus(x)); stable softplus without log1p:
    # softplus(x) = max(x, 0) + log(1 + exp(-|x|))
    sp = jnp.maximum(x, 0.0) + jnp.log(1.0 + jnp.exp(-jnp.abs(x)))
    return x * jnp.tanh(sp)


def _group_norm_cols(h, gamma_col, beta_col, n_groups, eps):
    """GroupNorm of a (C, L) tile (one batch element).

    Group sums are gathered and broadcast back with tiny membership matmuls
    built from 2-D iotas, which avoids reshapes/transposes (no sublane<->lane
    relayouts) and stays on well-supported MXU/VPU lowering paths.
    """
    C, L = h.shape
    cg = C // n_groups
    f32 = jnp.float32

    # M[g, c] = 1 if channel c belongs to group g             -> (G, C)
    c_idx = lax.broadcasted_iota(jnp.int32, (n_groups, C), 1)
    g_idx = lax.broadcasted_iota(jnp.int32, (n_groups, C), 0)
    m_gc = jnp.logical_and(c_idx >= g_idx * cg,
                           c_idx < (g_idx + 1) * cg).astype(f32)
    # Same membership, (C, G) orientation (built directly, no transpose).
    c_idx_t = lax.broadcasted_iota(jnp.int32, (C, n_groups), 0)
    g_idx_t = lax.broadcasted_iota(jnp.int32, (C, n_groups), 1)
    m_cg = jnp.logical_and(c_idx_t >= g_idx_t * cg,
                           c_idx_t < (g_idx_t + 1) * cg).astype(f32)

    cnt = float(cg * L)
    ch_sum = jnp.sum(h, axis=1, keepdims=True)           # (C, 1)
    ch_sqs = jnp.sum(h * h, axis=1, keepdims=True)       # (C, 1)
    g_mean = jnp.dot(m_gc, ch_sum, preferred_element_type=f32) / cnt   # (G, 1)
    g_msq = jnp.dot(m_gc, ch_sqs, preferred_element_type=f32) / cnt    # (G, 1)
    g_var = g_msq - g_mean * g_mean
    mean_c = jnp.dot(m_cg, g_mean, preferred_element_type=f32)         # (C, 1)
    var_c = jnp.dot(m_cg, g_var, preferred_element_type=f32)           # (C, 1)

    h_n = (h - mean_c) * lax.rsqrt(var_c + eps)
    return h_n * gamma_col + beta_col


def _cond_res_block_kernel(
        xp_ref,        # (1, Cin, L + 2*pad)  padded input, this batch element
        cond_ref,      # (1, Cd, 1)           cond vector (column)
        w1_ref,        # (K, Cout, Cin)       conv1 weight, tap-major
        b1_ref,        # (Cout, 1)
        g1_ref,        # (Cout, 1)            GroupNorm1 gamma
        be1_ref,       # (Cout, 1)            GroupNorm1 beta
        w2_ref,        # (K, Cout, Cout)
        b2_ref,        # (Cout, 1)
        g2_ref,        # (Cout, 1)
        be2_ref,       # (Cout, 1)
        wc_ref,        # (2*Cout, Cd)         cond Linear weight
        bc_ref,        # (2*Cout, 1)
        wr_ref,        # (Cout, Cin)          residual 1x1 conv weight
        br_ref,        # (Cout, 1)
        o_ref,         # (1, Cout, L)
        hpad_ref,      # VMEM scratch (Cout, L + 2*pad), f32
        *, L, K, n_groups, eps):
    f32 = jnp.float32
    pad = K // 2
    Cout = o_ref.shape[1]

    # ---- cond encoder: Mish -> Linear -> split into FiLM scale / bias ------
    c_col = _mish(cond_ref[0])                                    # (Cd, 1)
    embed = jnp.dot(wc_ref[...], c_col,
                    preferred_element_type=f32) + bc_ref[...]     # (2*Cout, 1)
    film_scale = embed[:Cout, :]                                  # (Cout, 1)
    film_bias = embed[Cout:, :]                                   # (Cout, 1)

    # ---- block 0: Conv1d(k=3, pad=1) -> GroupNorm -> Mish -------------------
    # Conv as K strided-slice matmuls on the padded input (no im2col in HBM).
    xp = xp_ref[0]                                                # (Cin, Lp)
    h = jnp.zeros((Cout, L), f32)
    for k in range(K):                                            # unrolled, K=3
        h = h + jnp.dot(w1_ref[k], xp[:, k:k + L],
                        preferred_element_type=f32)
    h = h + b1_ref[...]
    h = _group_norm_cols(h, g1_ref[...], be1_ref[...], n_groups, eps)
    h = _mish(h)

    # ---- FiLM conditioning ---------------------------------------------------
    h = film_scale * h + film_bias

    # ---- zero-pad the intermediate in VMEM for the second conv ---------------
    hpad_ref[...] = jnp.zeros_like(hpad_ref)
    hpad_ref[:, pad:pad + L] = h

    # ---- block 1: Conv1d(k=3, pad=1) -> GroupNorm -> Mish --------------------
    h2 = jnp.zeros((Cout, L), f32)
    for k in range(K):
        h2 = h2 + jnp.dot(w2_ref[k], hpad_ref[:, k:k + L],
                          preferred_element_type=f32)
    h2 = h2 + b2_ref[...]
    h2 = _group_norm_cols(h2, g2_ref[...], be2_ref[...], n_groups, eps)
    h2 = _mish(h2)

    # ---- residual 1x1 conv on the original (unpadded) input ------------------
    res = jnp.dot(wr_ref[...], xp[:, pad:pad + L],
                  preferred_element_type=f32) + br_ref[...]
    o_ref[0] = (h2 + res).astype(o_ref.dtype)


def conditional_residual_block_1d(
        x, cond,
        w1, b1, gn1_w, gn1_b,
        w2, b2, gn2_w, gn2_b,
        cond_w, cond_b,
        res_w=None, res_b=None,
        *, n_groups=8, eps=1e-5):
    """Fused forward pass of ConditionalResidualBlock1D."""
    N, Cin, L = x.shape
    Cout, _, K = w1.shape
    Cd = cond.shape[1]
    pad = K // 2
    Lp = L + 2 * pad
    f32 = jnp.float32

    # --- glue: pure layout work only (no im2col, no extra compute) ----------
    x_pad = jnp.pad(x.astype(f32), ((0, 0), (0, 0), (pad, pad)))  # (N, Cin, Lp)
    cond_col = cond.astype(f32)[:, :, None]                       # (N, Cd, 1)
    w1_k = jnp.transpose(w1.astype(f32), (2, 0, 1))               # (K, Cout, Cin)
    w2_k = jnp.transpose(w2.astype(f32), (2, 0, 1))               # (K, Cout, Cout)
    col = lambda v: v.astype(f32).reshape(-1, 1)
    if res_w is None:
        # residual_conv == nn.Identity()  (requires Cin == Cout)
        wr = jnp.eye(Cout, dtype=f32)
        br = jnp.zeros((Cout, 1), f32)
    else:
        wr = res_w.astype(f32)[:, :, 0]
        br = col(res_b)

    kernel = functools.partial(_cond_res_block_kernel,
                               L=L, K=K, n_groups=n_groups, eps=eps)

    def full(shape):
        return pl.BlockSpec(shape, lambda n: (0,) * len(shape))

    flops = int(N * (2 * Cout * Cin * K * L + 2 * Cout * Cout * K * L
                     + 2 * Cout * Cin * L + 2 * (2 * Cout) * Cd
                     + 16 * Cout * L))
    transcendentals = int(N * (2 * 3 * Cout * L + 3 * Cd))
    bytes_accessed = int(4 * (x_pad.size + cond.size + N * Cout * L
                              + w1_k.size + w2_k.size + wr.size
                              + 8 * Cout + 2 * Cout * Cd))

    out = pl.pallas_call(
        kernel,
        out_shape=jax.ShapeDtypeStruct((N, Cout, L), x.dtype),
        grid=(N,),
        in_specs=[
            pl.BlockSpec((1, Cin, Lp), lambda n: (n, 0, 0)),   # x_pad
            pl.BlockSpec((1, Cd, 1), lambda n: (n, 0, 0)),     # cond
            full((K, Cout, Cin)),                              # w1
            full((Cout, 1)),                                   # b1
            full((Cout, 1)),                                   # gn1 gamma
            full((Cout, 1)),                                   # gn1 beta
            full((K, Cout, Cout)),                             # w2
            full((Cout, 1)),                                   # b2
            full((Cout, 1)),                                   # gn2 gamma
            full((Cout, 1)),                                   # gn2 beta
            full((2 * Cout, Cd)),                              # cond Linear W
            full((2 * Cout, 1)),                               # cond Linear b
            full((Cout, Cin)),                                 # residual W
            full((Cout, 1)),                                   # residual b
        ],
        out_specs=pl.BlockSpec((1, Cout, L), lambda n: (n, 0, 0)),
        scratch_shapes=[pltpu.VMEM((Cout, Lp), f32)],
        compiler_params=pltpu.CompilerParams(
            dimension_semantics=("parallel",)),
        cost_estimate=pl.CostEstimate(flops=flops,
                                      transcendentals=transcendentals,
                                      bytes_accessed=bytes_accessed),
    )(
        x_pad, cond_col,
        w1_k, col(b1), col(gn1_w), col(gn1_b),
        w2_k, col(b2), col(gn2_w), col(gn2_b),
        cond_w.astype(f32), col(cond_b),
        wr, br,
    )
    return out


if __name__ == "__main__":
    key = jax.random.PRNGKey(0)
    keys = jax.random.split(key, 12)

    # Small shapes consistent with the module (n_groups=8 requires Cout % 8 == 0).
    N, Cin, Cout, L, Cd, G, K = 2, 8, 16, 16, 12, 8, 3

    x = jax.random.normal(keys[0], (N, Cin, L), jnp.float32)
    cond = jax.random.normal(keys[1], (N, Cd), jnp.float32)

    def uinit(k, shape, fan_in):
        bound = 1.0 / (fan_in ** 0.5)
        return jax.random.uniform(k, shape, jnp.float32, -bound, bound)

    w1 = uinit(keys[2], (Cout, Cin, K), Cin * K)
    b1 = uinit(keys[3], (Cout,), Cin * K)
    gn1_w = 1.0 + 0.1 * jax.random.normal(keys[4], (Cout,), jnp.float32)
    gn1_b = 0.1 * jax.random.normal(keys[5], (Cout,), jnp.float32)
    w2 = uinit(keys[6], (Cout, Cout, K), Cout * K)
    b2 = uinit(keys[7], (Cout,), Cout * K)
    gn2_w = 1.0 + 0.1 * jax.random.normal(keys[8], (Cout,), jnp.float32)
    gn2_b = 0.1 * jax.random.normal(keys[9], (Cout,), jnp.float32)
    cond_w = uinit(keys[10], (2 * Cout, Cd), Cd)
    cond_b = uinit(keys[11], (2 * Cout,), Cd)
    res_w = uinit(keys[2], (Cout, Cin, 1), Cin)     # Cin != Cout -> 1x1 conv
    res_b = uinit(keys[3], (Cout,), Cin)

    out = conditional_residual_block_1d(
        x, cond, w1, b1, gn1_w, gn1_b, w2, b2, gn2_w, gn2_b,
        cond_w, cond_b, res_w, res_b, n_groups=G)
    out = jax.block_until_ready(out)

    # ---- pure-JAX reference (mirrors the PyTorch forward) -------------------
    def conv1d(v, w, b, p):
        y = lax.conv_general_dilated(v, w, (1,), ((p, p),),
                                     dimension_numbers=("NCH", "OIH", "NCH"))
        return y + b[None, :, None]

    def groupnorm(v, gamma, beta):
        n, c, l = v.shape
        vg = v.reshape(n, G, c // G, l)
        mean = vg.mean(axis=(2, 3), keepdims=True)
        var = vg.var(axis=(2, 3), keepdims=True)
        vn = ((vg - mean) / jnp.sqrt(var + 1e-5)).reshape(n, c, l)
        return vn * gamma[None, :, None] + beta[None, :, None]

    def mish(v):
        return v * jnp.tanh(jax.nn.softplus(v))

    h_ref = mish(groupnorm(conv1d(x, w1, b1, 1), gn1_w, gn1_b))
    emb = mish(cond) @ cond_w.T + cond_b
    scale = emb[:, :Cout][:, :, None]
    fbias = emb[:, Cout:][:, :, None]
    h_ref = scale * h_ref + fbias
    h_ref = mish(groupnorm(conv1d(h_ref, w2, b2, 1), gn2_w, gn2_b))
    ref = h_ref + conv1d(x, res_w, res_b, 0)

    assert out.shape == (N, Cout, L)
    err = float(jnp.max(jnp.abs(out - ref)))
    assert jnp.allclose(out, ref, atol=2e-4, rtol=2e-4), err

    print("KERNEL_OK")
</pallas_src>

<mosaic_0001>
module attributes {stable_mosaic.version = 11 : i64} {
  func.func @_cond_res_block_kernel(%arg0: i32, %arg1: memref<1x8x18xf32, #tpu.memory_space<vmem>>, %arg2: memref<1x12x1xf32, #tpu.memory_space<vmem>>, %arg3: memref<3x16x8xf32, #tpu.memory_space<vmem>>, %arg4: memref<16x1xf32, #tpu.memory_space<vmem>>, %arg5: memref<16x1xf32, #tpu.memory_space<vmem>>, %arg6: memref<16x1xf32, #tpu.memory_space<vmem>>, %arg7: memref<3x16x16xf32, #tpu.memory_space<vmem>>, %arg8: memref<16x1xf32, #tpu.memory_space<vmem>>, %arg9: memref<16x1xf32, #tpu.memory_space<vmem>>, %arg10: memref<16x1xf32, #tpu.memory_space<vmem>>, %arg11: memref<32x12xf32, #tpu.memory_space<vmem>>, %arg12: memref<32x1xf32, #tpu.memory_space<vmem>>, %arg13: memref<16x8xf32, #tpu.memory_space<vmem>>, %arg14: memref<16x1xf32, #tpu.memory_space<vmem>>, %arg15: memref<1x16x16xf32, #tpu.memory_space<vmem>>, %arg16: memref<16x18xf32, #tpu.memory_space<vmem>>) attributes {dimension_semantics = [#tpu.dimension_semantics<parallel>], iteration_bounds = array<i64: 2>, scalar_prefetch = 0 : i64, scratch_operands = 1 : i64, tpu.core_type = #tpu.core_type<tc>, window_params = [{transform_indices = @transform_0, window_bounds = array<i64: 1, 8, 18>}, {transform_indices = @transform_1, window_bounds = array<i64: 1, 12, 1>}, {pipeline_mode = #tpu.pipeline_mode<synchronous>, transform_indices = @transform_2, window_bounds = array<i64: 3, 16, 8>}, {pipeline_mode = #tpu.pipeline_mode<synchronous>, transform_indices = @transform_3, window_bounds = array<i64: 16, 1>}, {pipeline_mode = #tpu.pipeline_mode<synchronous>, transform_indices = @transform_4, window_bounds = array<i64: 16, 1>}, {pipeline_mode = #tpu.pipeline_mode<synchronous>, transform_indices = @transform_5, window_bounds = array<i64: 16, 1>}, {pipeline_mode = #tpu.pipeline_mode<synchronous>, transform_indices = @transform_6, window_bounds = array<i64: 3, 16, 16>}, {pipeline_mode = #tpu.pipeline_mode<synchronous>, transform_indices = @transform_7, window_bounds = array<i64: 16, 1>}, {pipeline_mode = #tpu.pipeline_mode<synchronous>, transform_indices = @transform_8, window_bounds = array<i64: 16, 1>}, {pipeline_mode = #tpu.pipeline_mode<synchronous>, transform_indices = @transform_9, window_bounds = array<i64: 16, 1>}, {pipeline_mode = #tpu.pipeline_mode<synchronous>, transform_indices = @transform_10, window_bounds = array<i64: 32, 12>}, {pipeline_mode = #tpu.pipeline_mode<synchronous>, transform_indices = @transform_11, window_bounds = array<i64: 32, 1>}, {pipeline_mode = #tpu.pipeline_mode<synchronous>, transform_indices = @transform_12, window_bounds = array<i64: 16, 8>}, {pipeline_mode = #tpu.pipeline_mode<synchronous>, transform_indices = @transform_13, window_bounds = array<i64: 16, 1>}, {transform_indices = @transform_14, window_bounds = array<i64: 1, 16, 16>}]} {
    %c0 = arith.constant 0 : index
    %c0_0 = arith.constant 0 : index
    %c0_1 = arith.constant 0 : index
    %0 = vector.load %arg2[%c0, %c0_0, %c0_1] : memref<1x12x1xf32, #tpu.memory_space<vmem>>, vector<1x12x1xf32>
    %1 = vector.shape_cast %0 : vector<1x12x1xf32> to vector<12x1xf32>
    %cst = arith.constant 0.000000e+00 : f32
    %2 = vector.broadcast %cst : f32 to vector<12x1xf32>
    %3 = arith.maximumf %1, %2 : vector<12x1xf32>
    %4 = math.absf %1 : vector<12x1xf32>
    %cst_2 = arith.constant 0.000000e+00 : f32
    %5 = vector.broadcast %cst_2 : f32 to vector<12x1xf32>
    %6 = arith.subf %5, %4 : vector<12x1xf32>
    %7 = math.exp %6 : vector<12x1xf32>
    %cst_3 = arith.constant 1.000000e+00 : f32
    %8 = vector.broadcast %cst_3 : f32 to vector<12x1xf32>
    %9 = arith.addf %8, %7 : vector<12x1xf32>
    %10 = math.log %9 : vector<12x1xf32>
    %11 = arith.addf %3, %10 : vector<12x1xf32>
    %12 = math.tanh %11 : vector<12x1xf32>
    %13 = arith.mulf %1, %12 : vector<12x1xf32>
    %c0_4 = arith.constant 0 : index
    %c0_5 = arith.constant 0 : index
    %14 = vector.load %arg11[%c0_4, %c0_5] : memref<32x12xf32, #tpu.memory_space<vmem>>, vector<32x12xf32>
    %cst_6 = arith.constant dense<0.000000e+00> : vector<32x1xf32>
    %15 = tpu.matmul %14, %13, %cst_6 {dimension_numbers = #tpu.dot_dimension_numbers<[1], [0], [0], [1], [0, 0, 1, 1], [], []>} : vector<32x12xf32>, vector<12x1xf32>, vector<32x1xf32> -> vector<32x1xf32>
    %c0_7 = arith.constant 0 : index
    %c0_8 = arith.constant 0 : index
    %16 = vector.load %arg12[%c0_7, %c0_8] : memref<32x1xf32, #tpu.memory_space<vmem>>, vector<32x1xf32>
    %17 = arith.addf %15, %16 : vector<32x1xf32>
    %18 = vector.extract_strided_slice %17 {offsets = [0, 0], sizes = [16, 1], strides = [1, 1]} : vector<32x1xf32> to vector<16x1xf32>
    %19 = vector.extract_strided_slice %17 {offsets = [16, 0], sizes = [16, 1], strides = [1, 1]} : vector<32x1xf32> to vector<16x1xf32>
    %c0_9 = arith.constant 0 : index
    %c0_10 = arith.constant 0 : index
    %c0_11 = arith.constant 0 : index
    %20 = vector.load %arg1[%c0_9, %c0_10, %c0_11] : memref<1x8x18xf32, #tpu.memory_space<vmem>>, vector<1x8x18xf32>
    %21 = vector.shape_cast %20 : vector<1x8x18xf32> to vector<8x18xf32>
    %cst_12 = arith.constant 0.000000e+00 : f32
    %22 = vector.broadcast %cst_12 : f32 to vector<16x16xf32>
    %c0_13 = arith.constant 0 : index
    %c0_14 = arith.constant 0 : index
    %c0_15 = arith.constant 0 : index
    %23 = vector.load %arg3[%c0_13, %c0_14, %c0_15] : memref<3x16x8xf32, #tpu.memory_space<vmem>>, vector<1x16x8xf32>
    %24 = vector.shape_cast %23 : vector<1x16x8xf32> to vector<16x8xf32>
    %25 = vector.extract_strided_slice %21 {offsets = [0, 0], sizes = [8, 16], strides = [1, 1]} : vector<8x18xf32> to vector<8x16xf32>
    %cst_16 = arith.constant dense<0.000000e+00> : vector<16x16xf32>
    %26 = tpu.matmul %24, %25, %cst_16 {dimension_numbers = #tpu.dot_dimension_numbers<[1], [0], [0], [1], [0, 0, 1, 1], [], []>} : vector<16x8xf32>, vector<8x16xf32>, vector<16x16xf32> -> vector<16x16xf32>
    %27 = arith.addf %22, %26 : vector<16x16xf32>
    %c1 = arith.constant 1 : index
    %c0_17 = arith.constant 0 : index
    %c0_18 = arith.constant 0 : index
    %28 = vector.load %arg3[%c1, %c0_17, %c0_18] : memref<3x16x8xf32, #tpu.memory_space<vmem>>, vector<1x16x8xf32>
    %29 = vector.shape_cast %28 : vector<1x16x8xf32> to vector<16x8xf32>
    %30 = vector.extract_strided_slice %21 {offsets = [0, 1], sizes = [8, 16], strides = [1, 1]} : vector<8x18xf32> to vector<8x16xf32>
    %cst_19 = arith.constant dense<0.000000e+00> : vector<16x16xf32>
    %31 = tpu.matmul %29, %30, %cst_19 {dimension_numbers = #tpu.dot_dimension_numbers<[1], [0], [0], [1], [0, 0, 1, 1], [], []>} : vector<16x8xf32>, vector<8x16xf32>, vector<16x16xf32> -> vector<16x16xf32>
    %32 = arith.addf %27, %31 : vector<16x16xf32>
    %c2 = arith.constant 2 : index
    %c0_20 = arith.constant 0 : index
    %c0_21 = arith.constant 0 : index
    %33 = vector.load %arg3[%c2, %c0_20, %c0_21] : memref<3x16x8xf32, #tpu.memory_space<vmem>>, vector<1x16x8xf32>
    %34 = vector.shape_cast %33 : vector<1x16x8xf32> to vector<16x8xf32>
    %35 = vector.extract_strided_slice %21 {offsets = [0, 2], sizes = [8, 16], strides = [1, 1]} : vector<8x18xf32> to vector<8x16xf32>
    %cst_22 = arith.constant dense<0.000000e+00> : vector<16x16xf32>
    %36 = tpu.matmul %34, %35, %cst_22 {dimension_numbers = #tpu.dot_dimension_numbers<[1], [0], [0], [1], [0, 0, 1, 1], [], []>} : vector<16x8xf32>, vector<8x16xf32>, vector<16x16xf32> -> vector<16x16xf32>
    %37 = arith.addf %32, %36 : vector<16x16xf32>
    %c0_23 = arith.constant 0 : index
    %c0_24 = arith.constant 0 : index
    %38 = vector.load %arg4[%c0_23, %c0_24] : memref<16x1xf32, #tpu.memory_space<vmem>>, vector<16x1xf32>
    %39 = vector.broadcast %38 : vector<16x1xf32> to vector<16x16xf32>
    %40 = arith.addf %37, %39 : vector<16x16xf32>
    %c0_25 = arith.constant 0 : index
    %c0_26 = arith.constant 0 : index
    %41 = vector.load %arg5[%c0_25, %c0_26] : memref<16x1xf32, #tpu.memory_space<vmem>>, vector<16x1xf32>
    %c0_27 = arith.constant 0 : index
    %c0_28 = arith.constant 0 : index
    %42 = vector.load %arg6[%c0_27, %c0_28] : memref<16x1xf32, #tpu.memory_space<vmem>>, vector<16x1xf32>
    %43 = tpu.iota {dimensions = array<i32: 1>} : vector<8x16xi32>
    %44 = tpu.iota {dimensions = array<i32: 0>} : vector<8x16xi32>
    %c2_i32 = arith.constant 2 : i32
    %45 = vector.broadcast %c2_i32 : i32 to vector<8x16xi32>
    %46 = arith.muli %44, %45 : vector<8x16xi32>
    %47 = arith.cmpi sge, %43, %46 : vector<8x16xi32>
    %c1_i32 = arith.constant 1 : i32
    %48 = vector.broadcast %c1_i32 : i32 to vector<8x16xi32>
    %49 = arith.addi %44, %48 : vector<8x16xi32>
    %c2_i32_29 = arith.constant 2 : i32
    %50 = vector.broadcast %c2_i32_29 : i32 to vector<8x16xi32>
    %51 = arith.muli %49, %50 : vector<8x16xi32>
    %52 = arith.cmpi slt, %43, %51 : vector<8x16xi32>
    %53 = arith.andi %47, %52 : vector<8x16xi1>
    %54 = arith.extui %53 : vector<8x16xi1> to vector<8x16xi32>
    %55 = arith.sitofp %54 : vector<8x16xi32> to vector<8x16xf32>
    %56 = tpu.iota {dimensions = array<i32: 0>} : vector<16x8xi32>
    %57 = tpu.iota {dimensions = array<i32: 1>} : vector<16x8xi32>
    %c2_i32_30 = arith.constant 2 : i32
    %58 = vector.broadcast %c2_i32_30 : i32 to vector<16x8xi32>
    %59 = arith.muli %57, %58 : vector<16x8xi32>
    %60 = arith.cmpi sge, %56, %59 : vector<16x8xi32>
    %c1_i32_31 = arith.constant 1 : i32
    %61 = vector.broadcast %c1_i32_31 : i32 to vector<16x8xi32>
    %62 = arith.addi %57, %61 : vector<16x8xi32>
    %c2_i32_32 = arith.constant 2 : i32
    %63 = vector.broadcast %c2_i32_32 : i32 to vector<16x8xi32>
    %64 = arith.muli %62, %63 : vector<16x8xi32>
    %65 = arith.cmpi slt, %56, %64 : vector<16x8xi32>
    %66 = arith.andi %60, %65 : vector<16x8xi1>
    %67 = arith.extui %66 : vector<16x8xi1> to vector<16x8xi32>
    %68 = arith.sitofp %67 : vector<16x8xi32> to vector<16x8xf32>
    %cst_33 = arith.constant dense<0.000000e+00> : vector<16xf32>
    %69 = vector.multi_reduction <add>, %40, %cst_33 [1] : vector<16x16xf32> to vector<16xf32>
    %70 = vector.shape_cast %69 : vector<16xf32> to vector<16x1xf32>
    %71 = arith.mulf %40, %40 : vector<16x16xf32>
    %cst_34 = arith.constant dense<0.000000e+00> : vector<16xf32>
    %72 = vector.multi_reduction <add>, %71, %cst_34 [1] : vector<16x16xf32> to vector<16xf32>
    %73 = vector.shape_cast %72 : vector<16xf32> to vector<16x1xf32>
    %cst_35 = arith.constant dense<0.000000e+00> : vector<8x1xf32>
    %74 = tpu.matmul %55, %70, %cst_35 {dimension_numbers = #tpu.dot_dimension_numbers<[1], [0], [0], [1], [0, 0, 1, 1], [], []>} : vector<8x16xf32>, vector<16x1xf32>, vector<8x1xf32> -> vector<8x1xf32>
    %cst_36 = arith.constant 3.200000e+01 : f32
    %75 = vector.broadcast %cst_36 : f32 to vector<8x1xf32>
    %76 = arith.divf %74, %75 : vector<8x1xf32>
    %cst_37 = arith.constant dense<0.000000e+00> : vector<8x1xf32>
    %77 = tpu.matmul %55, %73, %cst_37 {dimension_numbers = #tpu.dot_dimension_numbers<[1], [0], [0], [1], [0, 0, 1, 1], [], []>} : vector<8x16xf32>, vector<16x1xf32>, vector<8x1xf32> -> vector<8x1xf32>
    %cst_38 = arith.constant 3.200000e+01 : f32
    %78 = vector.broadcast %cst_38 : f32 to vector<8x1xf32>
    %79 = arith.divf %77, %78 : vector<8x1xf32>
    %80 = arith.mulf %76, %76 : vector<8x1xf32>
    %81 = arith.subf %79, %80 : vector<8x1xf32>
    %cst_39 = arith.constant dense<0.000000e+00> : vector<16x1xf32>
    %82 = tpu.matmul %68, %76, %cst_39 {dimension_numbers = #tpu.dot_dimension_numbers<[1], [0], [0], [1], [0, 0, 1, 1], [], []>} : vector<16x8xf32>, vector<8x1xf32>, vector<16x1xf32> -> vector<16x1xf32>
    %cst_40 = arith.constant dense<0.000000e+00> : vector<16x1xf32>
    %83 = tpu.matmul %68, %81, %cst_40 {dimension_numbers = #tpu.dot_dimension_numbers<[1], [0], [0], [1], [0, 0, 1, 1], [], []>} : vector<16x8xf32>, vector<8x1xf32>, vector<16x1xf32> -> vector<16x1xf32>
    %84 = vector.broadcast %82 : vector<16x1xf32> to vector<16x16xf32>
    %85 = arith.subf %40, %84 : vector<16x16xf32>
    %cst_41 = arith.constant 9.99999974E-6 : f32
    %86 = vector.broadcast %cst_41 : f32 to vector<16x1xf32>
    %87 = arith.addf %83, %86 : vector<16x1xf32>
    %88 = math.rsqrt %87 : vector<16x1xf32>
    %89 = vector.broadcast %88 : vector<16x1xf32> to vector<16x16xf32>
    %90 = arith.mulf %85, %89 : vector<16x16xf32>
    %91 = vector.broadcast %41 : vector<16x1xf32> to vector<16x16xf32>
    %92 = arith.mulf %90, %91 : vector<16x16xf32>
    %93 = vector.broadcast %42 : vector<16x1xf32> to vector<16x16xf32>
    %94 = arith.addf %92, %93 : vector<16x16xf32>
    %cst_42 = arith.constant 0.000000e+00 : f32
    %95 = vector.broadcast %cst_42 : f32 to vector<16x16xf32>
    %96 = arith.maximumf %94, %95 : vector<16x16xf32>
    %97 = math.absf %94 : vector<16x16xf32>
    %cst_43 = arith.constant 0.000000e+00 : f32
    %98 = vector.broadcast %cst_43 : f32 to vector<16x16xf32>
    %99 = arith.subf %98, %97 : vector<16x16xf32>
    %100 = math.exp %99 : vector<16x16xf32>
    %cst_44 = arith.constant 1.000000e+00 : f32
    %101 = vector.broadcast %cst_44 : f32 to vector<16x16xf32>
    %102 = arith.addf %101, %100 : vector<16x16xf32>
    %103 = math.log %102 : vector<16x16xf32>
    %104 = arith.addf %96, %103 : vector<16x16xf32>
    %105 = math.tanh %104 : vector<16x16xf32>
    %106 = arith.mulf %94, %105 : vector<16x16xf32>
    %107 = vector.broadcast %18 : vector<16x1xf32> to vector<16x16xf32>
    %108 = arith.mulf %107, %106 : vector<16x16xf32>
    %109 = vector.broadcast %19 : vector<16x1xf32> to vector<16x16xf32>
    %110 = arith.addf %108, %109 : vector<16x16xf32>
    %cst_45 = arith.constant 0.000000e+00 : f32
    %111 = vector.broadcast %cst_45 : f32 to vector<16x18xf32>
    %c0_46 = arith.constant 0 : index
    %c0_47 = arith.constant 0 : index
    %112 = vector.load %arg16[%c0_46, %c0_47] : memref<16x18xf32, #tpu.memory_space<vmem>>, vector<16x18xf32>
    tpu.vector_store %arg16[%c0_46, %c0_47], %111 {strides = array<i32>} : memref<16x18xf32, #tpu.memory_space<vmem>>, vector<16x18xf32>,
    %c0_48 = arith.constant 0 : index
    %c1_49 = arith.constant 1 : index
    %113 = vector.load %arg16[%c0_48, %c1_49] : memref<16x18xf32, #tpu.memory_space<vmem>>, vector<16x16xf32>
    tpu.vector_store %arg16[%c0_48, %c1_49], %110 {strides = array<i32>} : memref<16x18xf32, #tpu.memory_space<vmem>>, vector<16x16xf32>,
    %cst_50 = arith.constant 0.000000e+00 : f32
    %114 = vector.broadcast %cst_50 : f32 to vector<16x16xf32>
    %c0_51 = arith.constant 0 : index
    %c0_52 = arith.constant 0 : index
    %c0_53 = arith.constant 0 : index
    %115 = vector.load %arg7[%c0_51, %c0_52, %c0_53] : memref<3x16x16xf32, #tpu.memory_space<vmem>>, vector<1x16x16xf32>
    %116 = vector.shape_cast %115 : vector<1x16x16xf32> to vector<16x16xf32>
    %c0_54 = arith.constant 0 : index
    %c0_55 = arith.constant 0 : index
    %117 = vector.load %arg16[%c0_54, %c0_55] : memref<16x18xf32, #tpu.memory_space<vmem>>, vector<16x16xf32>
    %cst_56 = arith.constant dense<0.000000e+00> : vector<16x16xf32>
    %118 = tpu.matmul %116, %117, %cst_56 {dimension_numbers = #tpu.dot_dimension_numbers<[1], [0], [0], [1], [0, 0, 1, 1], [], []>} : vector<16x16xf32>, vector<16x16xf32>, vector<16x16xf32> -> vector<16x16xf32>
    %119 = arith.addf %114, %118 : vector<16x16xf32>
    %c1_57 = arith.constant 1 : index
    %c0_58 = arith.constant 0 : index
    %c0_59 = arith.constant 0 : index
    %120 = vector.load %arg7[%c1_57, %c0_58, %c0_59] : memref<3x16x16xf32, #tpu.memory_space<vmem>>, vector<1x16x16xf32>
    %121 = vector.shape_cast %120 : vector<1x16x16xf32> to vector<16x16xf32>
    %c0_60 = arith.constant 0 : index
    %c1_61 = arith.constant 1 : index
    %122 = vector.load %arg16[%c0_60, %c1_61] : memref<16x18xf32, #tpu.memory_space<vmem>>, vector<16x16xf32>
    %cst_62 = arith.constant dense<0.000000e+00> : vector<16x16xf32>
    %123 = tpu.matmul %121, %122, %cst_62 {dimension_numbers = #tpu.dot_dimension_numbers<[1], [0], [0], [1], [0, 0, 1, 1], [], []>} : vector<16x16xf32>, vector<16x16xf32>, vector<16x16xf32> -> vector<16x16xf32>
    %124 = arith.addf %119, %123 : vector<16x16xf32>
    %c2_63 = arith.constant 2 : index
    %c0_64 = arith.constant 0 : index
    %c0_65 = arith.constant 0 : index
    %125 = vector.load %arg7[%c2_63, %c0_64, %c0_65] : memref<3x16x16xf32, #tpu.memory_space<vmem>>, vector<1x16x16xf32>
    %126 = vector.shape_cast %125 : vector<1x16x16xf32> to vector<16x16xf32>
    %c0_66 = arith.constant 0 : index
    %c2_67 = arith.constant 2 : index
    %127 = vector.load %arg16[%c0_66, %c2_67] : memref<16x18xf32, #tpu.memory_space<vmem>>, vector<16x16xf32>
    %cst_68 = arith.constant dense<0.000000e+00> : vector<16x16xf32>
    %128 = tpu.matmul %126, %127, %cst_68 {dimension_numbers = #tpu.dot_dimension_numbers<[1], [0], [0], [1], [0, 0, 1, 1], [], []>} : vector<16x16xf32>, vector<16x16xf32>, vector<16x16xf32> -> vector<16x16xf32>
    %129 = arith.addf %124, %128 : vector<16x16xf32>
    %c0_69 = arith.constant 0 : index
    %c0_70 = arith.constant 0 : index
    %130 = vector.load %arg8[%c0_69, %c0_70] : memref<16x1xf32, #tpu.memory_space<vmem>>, vector<16x1xf32>
    %131 = vector.broadcast %130 : vector<16x1xf32> to vector<16x16xf32>
    %132 = arith.addf %129, %131 : vector<16x16xf32>
    %c0_71 = arith.constant 0 : index
    %c0_72 = arith.constant 0 : index
    %133 = vector.load %arg9[%c0_71, %c0_72] : memref<16x1xf32, #tpu.memory_space<vmem>>, vector<16x1xf32>
    %c0_73 = arith.constant 0 : index
    %c0_74 = arith.constant 0 : index
    %134 = vector.load %arg10[%c0_73, %c0_74] : memref<16x1xf32, #tpu.memory_space<vmem>>, vector<16x1xf32>
    %135 = tpu.iota {dimensions = array<i32: 1>} : vector<8x16xi32>
    %136 = tpu.iota {dimensions = array<i32: 0>} : vector<8x16xi32>
    %c2_i32_75 = arith.constant 2 : i32
    %137 = vector.broadcast %c2_i32_75 : i32 to vector<8x16xi32>
    %138 = arith.muli %136, %137 : vector<8x16xi32>
    %139 = arith.cmpi sge, %135, %138 : vector<8x16xi32>
    %c1_i32_76 = arith.constant 1 : i32
    %140 = vector.broadcast %c1_i32_76 : i32 to vector<8x16xi32>
    %141 = arith.addi %136, %140 : vector<8x16xi32>
    %c2_i32_77 = arith.constant 2 : i32
    %142 = vector.broadcast %c2_i32_77 : i32 to vector<8x16xi32>
    %143 = arith.muli %141, %142 : vector<8x16xi32>
    %144 = arith.cmpi slt, %135, %143 : vector<8x16xi32>
    %145 = arith.andi %139, %144 : vector<8x16xi1>
    %146 = arith.extui %145 : vector<8x16xi1> to vector<8x16xi32>
    %147 = arith.sitofp %146 : vector<8x16xi32> to vector<8x16xf32>
    %148 = tpu.iota {dimensions = array<i32: 0>} : vector<16x8xi32>
    %149 = tpu.iota {dimensions = array<i32: 1>} : vector<16x8xi32>
    %c2_i32_78 = arith.constant 2 : i32
    %150 = vector.broadcast %c2_i32_78 : i32 to vector<16x8xi32>
    %151 = arith.muli %149, %150 : vector<16x8xi32>
    %152 = arith.cmpi sge, %148, %151 : vector<16x8xi32>
    %c1_i32_79 = arith.constant 1 : i32
    %153 = vector.broadcast %c1_i32_79 : i32 to vector<16x8xi32>
    %154 = arith.addi %149, %153 : vector<16x8xi32>
    %c2_i32_80 = arith.constant 2 : i32
    %155 = vector.broadcast %c2_i32_80 : i32 to vector<16x8xi32>
    %156 = arith.muli %154, %155 : vector<16x8xi32>
    %157 = arith.cmpi slt, %148, %156 : vector<16x8xi32>
    %158 = arith.andi %152, %157 : vector<16x8xi1>
    %159 = arith.extui %158 : vector<16x8xi1> to vector<16x8xi32>
    %160 = arith.sitofp %159 : vector<16x8xi32> to vector<16x8xf32>
    %cst_81 = arith.constant dense<0.000000e+00> : vector<16xf32>
    %161 = vector.multi_reduction <add>, %132, %cst_81 [1] : vector<16x16xf32> to vector<16xf32>
    %162 = vector.shape_cast %161 : vector<16xf32> to vector<16x1xf32>
    %163 = arith.mulf %132, %132 : vector<16x16xf32>
    %cst_82 = arith.constant dense<0.000000e+00> : vector<16xf32>
    %164 = vector.multi_reduction <add>, %163, %cst_82 [1] : vector<16x16xf32> to vector<16xf32>
    %165 = vector.shape_cast %164 : vector<16xf32> to vector<16x1xf32>
    %cst_83 = arith.constant dense<0.000000e+00> : vector<8x1xf32>
    %166 = tpu.matmul %147, %162, %cst_83 {dimension_numbers = #tpu.dot_dimension_numbers<[1], [0], [0], [1], [0, 0, 1, 1], [], []>} : vector<8x16xf32>, vector<16x1xf32>, vector<8x1xf32> -> vector<8x1xf32>
    %cst_84 = arith.constant 3.200000e+01 : f32
    %167 = vector.broadcast %cst_84 : f32 to vector<8x1xf32>
    %168 = arith.divf %166, %167 : vector<8x1xf32>
    %cst_85 = arith.constant dense<0.000000e+00> : vector<8x1xf32>
    %169 = tpu.matmul %147, %165, %cst_85 {dimension_numbers = #tpu.dot_dimension_numbers<[1], [0], [0], [1], [0, 0, 1, 1], [], []>} : vector<8x16xf32>, vector<16x1xf32>, vector<8x1xf32> -> vector<8x1xf32>
    %cst_86 = arith.constant 3.200000e+01 : f32
    %170 = vector.broadcast %cst_86 : f32 to vector<8x1xf32>
    %171 = arith.divf %169, %170 : vector<8x1xf32>
    %172 = arith.mulf %168, %168 : vector<8x1xf32>
    %173 = arith.subf %171, %172 : vector<8x1xf32>
    %cst_87 = arith.constant dense<0.000000e+00> : vector<16x1xf32>
    %174 = tpu.matmul %160, %168, %cst_87 {dimension_numbers = #tpu.dot_dimension_numbers<[1], [0], [0], [1], [0, 0, 1, 1], [], []>} : vector<16x8xf32>, vector<8x1xf32>, vector<16x1xf32> -> vector<16x1xf32>
    %cst_88 = arith.constant dense<0.000000e+00> : vector<16x1xf32>
    %175 = tpu.matmul %160, %173, %cst_88 {dimension_numbers = #tpu.dot_dimension_numbers<[1], [0], [0], [1], [0, 0, 1, 1], [], []>} : vector<16x8xf32>, vector<8x1xf32>, vector<16x1xf32> -> vector<16x1xf32>
    %176 = vector.broadcast %174 : vector<16x1xf32> to vector<16x16xf32>
    %177 = arith.subf %132, %176 : vector<16x16xf32>
    %cst_89 = arith.constant 9.99999974E-6 : f32
    %178 = vector.broadcast %cst_89 : f32 to vector<16x1xf32>
    %179 = arith.addf %175, %178 : vector<16x1xf32>
    %180 = math.rsqrt %179 : vector<16x1xf32>
    %181 = vector.broadcast %180 : vector<16x1xf32> to vector<16x16xf32>
    %182 = arith.mulf %177, %181 : vector<16x16xf32>
    %183 = vector.broadcast %133 : vector<16x1xf32> to vector<16x16xf32>
    %184 = arith.mulf %182, %183 : vector<16x16xf32>
    %185 = vector.broadcast %134 : vector<16x1xf32> to vector<16x16xf32>
    %186 = arith.addf %184, %185 : vector<16x16xf32>
    %cst_90 = arith.constant 0.000000e+00 : f32
    %187 = vector.broadcast %cst_90 : f32 to vector<16x16xf32>
    %188 = arith.maximumf %186, %187 : vector<16x16xf32>
    %189 = math.absf %186 : vector<16x16xf32>
    %cst_91 = arith.constant 0.000000e+00 : f32
    %190 = vector.broadcast %cst_91 : f32 to vector<16x16xf32>
    %191 = arith.subf %190, %189 : vector<16x16xf32>
    %192 = math.exp %191 : vector<16x16xf32>
    %cst_92 = arith.constant 1.000000e+00 : f32
    %193 = vector.broadcast %cst_92 : f32 to vector<16x16xf32>
    %194 = arith.addf %193, %192 : vector<16x16xf32>
    %195 = math.log %194 : vector<16x16xf32>
    %196 = arith.addf %188, %195 : vector<16x16xf32>
    %197 = math.tanh %196 : vector<16x16xf32>
    %198 = arith.mulf %186, %197 : vector<16x16xf32>
    %c0_93 = arith.constant 0 : index
    %c0_94 = arith.constant 0 : index
    %199 = vector.load %arg13[%c0_93, %c0_94] : memref<16x8xf32, #tpu.memory_space<vmem>>, vector<16x8xf32>
    %200 = vector.extract_strided_slice %21 {offsets = [0, 1], sizes = [8, 16], strides = [1, 1]} : vector<8x18xf32> to vector<8x16xf32>
    %cst_95 = arith.constant dense<0.000000e+00> : vector<16x16xf32>
    %201 = tpu.matmul %199, %200, %cst_95 {dimension_numbers = #tpu.dot_dimension_numbers<[1], [0], [0], [1], [0, 0, 1, 1], [], []>} : vector<16x8xf32>, vector<8x16xf32>, vector<16x16xf32> -> vector<16x16xf32>
    %c0_96 = arith.constant 0 : index
    %c0_97 = arith.constant 0 : index
    %202 = vector.load %arg14[%c0_96, %c0_97] : memref<16x1xf32, #tpu.memory_space<vmem>>, vector<16x1xf32>
    %203 = vector.broadcast %202 : vector<16x1xf32> to vector<16x16xf32>
    %204 = arith.addf %201, %203 : vector<16x16xf32>
    %205 = arith.addf %198, %204 : vector<16x16xf32>
    %c0_98 = arith.constant 0 : index
    %c0_99 = arith.constant 0 : index
    %c0_100 = arith.constant 0 : index
    %206 = vector.load %arg15[%c0_98, %c0_99, %c0_100] : memref<1x16x16xf32, #tpu.memory_space<vmem>>, vector<1x16x16xf32>
    %207 = vector.shape_cast %206 : vector<1x16x16xf32> to vector<16x16xf32>
    %208 = vector.shape_cast %205 : vector<16x16xf32> to vector<1x16x16xf32>
    tpu.vector_store %arg15[%c0_98, %c0_99, %c0_100], %208 {strides = array<i32>} : memref<1x16x16xf32, #tpu.memory_space<vmem>>, vector<1x16x16xf32>,
    return
  }
  func.func @transform_0(%arg0: i32) -> (i32, i32, i32) {
    %c0_i32 = arith.constant 0 : i32
    %c0_i32_0 = arith.constant 0 : i32
    %c0_i32_1 = arith.constant 0 : i32
    return %arg0, %c0_i32, %c0_i32_0 : i32, i32, i32
  }
  func.func @transform_1(%arg0: i32) -> (i32, i32, i32) {
    %c0_i32 = arith.constant 0 : i32
    %c0_i32_0 = arith.constant 0 : i32
    %c0_i32_1 = arith.constant 0 : i32
    return %arg0, %c0_i32, %c0_i32_0 : i32, i32, i32
  }
  func.func @transform_2(%arg0: i32) -> (i32, i32, i32) {
    %c0_i32 = arith.constant 0 : i32
    %c0_i32_0 = arith.constant 0 : i32
    %c0_i32_1 = arith.constant 0 : i32
    %c0_i32_2 = arith.constant 0 : i32
    return %c0_i32, %c0_i32_0, %c0_i32_1 : i32, i32, i32
  }
  func.func @transform_3(%arg0: i32) -> (i32, i32) {
    %c0_i32 = arith.constant 0 : i32
    %c0_i32_0 = arith.constant 0 : i32
    %c0_i32_1 = arith.constant 0 : i32
    return %c0_i32, %c0_i32_0 : i32, i32
  }
  func.func @transform_4(%arg0: i32) -> (i32, i32) {
    %c0_i32 = arith.constant 0 : i32
    %c0_i32_0 = arith.constant 0 : i32
    %c0_i32_1 = arith.constant 0 : i32
    return %c0_i32, %c0_i32_0 : i32, i32
  }
  func.func @transform_5(%arg0: i32) -> (i32, i32) {
    %c0_i32 = arith.constant 0 : i32
    %c0_i32_0 = arith.constant 0 : i32
    %c0_i32_1 = arith.constant 0 : i32
    return %c0_i32, %c0_i32_0 : i32, i32
  }
  func.func @transform_6(%arg0: i32) -> (i32, i32, i32) {
    %c0_i32 = arith.constant 0 : i32
    %c0_i32_0 = arith.constant 0 : i32
    %c0_i32_1 = arith.constant 0 : i32
    %c0_i32_2 = arith.constant 0 : i32
    return %c0_i32, %c0_i32_0, %c0_i32_1 : i32, i32, i32
  }
  func.func @transform_7(%arg0: i32) -> (i32, i32) {
    %c0_i32 = arith.constant 0 : i32
    %c0_i32_0 = arith.constant 0 : i32
    %c0_i32_1 = arith.constant 0 : i32
    return %c0_i32, %c0_i32_0 : i32, i32
  }
  func.func @transform_8(%arg0: i32) -> (i32, i32) {
    %c0_i32 = arith.constant 0 : i32
    %c0_i32_0 = arith.constant 0 : i32
    %c0_i32_1 = arith.constant 0 : i32
    return %c0_i32, %c0_i32_0 : i32, i32
  }
  func.func @transform_9(%arg0: i32) -> (i32, i32) {
    %c0_i32 = arith.constant 0 : i32
    %c0_i32_0 = arith.constant 0 : i32
    %c0_i32_1 = arith.constant 0 : i32
    return %c0_i32, %c0_i32_0 : i32, i32
  }
  func.func @transform_10(%arg0: i32) -> (i32, i32) {
    %c0_i32 = arith.constant 0 : i32
    %c0_i32_0 = arith.constant 0 : i32
    %c0_i32_1 = arith.constant 0 : i32
    return %c0_i32, %c0_i32_0 : i32, i32
  }
  func.func @transform_11(%arg0: i32) -> (i32, i32) {
    %c0_i32 = arith.constant 0 : i32
    %c0_i32_0 = arith.constant 0 : i32
    %c0_i32_1 = arith.constant 0 : i32
    return %c0_i32, %c0_i32_0 : i32, i32
  }
  func.func @transform_12(%arg0: i32) -> (i32, i32) {
    %c0_i32 = arith.constant 0 : i32
    %c0_i32_0 = arith.constant 0 : i32
    %c0_i32_1 = arith.constant 0 : i32
    return %c0_i32, %c0_i32_0 : i32, i32
  }
  func.func @transform_13(%arg0: i32) -> (i32, i32) {
    %c0_i32 = arith.constant 0 : i32
    %c0_i32_0 = arith.constant 0 : i32
    %c0_i32_1 = arith.constant 0 : i32
    return %c0_i32, %c0_i32_0 : i32, i32
  }
  func.func @transform_14(%arg0: i32) -> (i32, i32, i32) {
    %c0_i32 = arith.constant 0 : i32
    %c0_i32_0 = arith.constant 0 : i32
    %c0_i32_1 = arith.constant 0 : i32
    return %arg0, %c0_i32, %c0_i32_0 : i32, i32, i32
  }
}

</mosaic_0001>

<llo_original>
// kernel: tpu_custom_call.1
$region0: #{tpu_custom_call.1}
  #allocation0 [shape = 'u32[]', space=smem, size = 0x4, offset = 0x4, fixed_abs, tag = 'smem constant byte address 0x4 - core index']
  #allocation1 [shape = 'u32[144,128]{1,0:T(1,128)}', space=vmem, size = 0x12000, scoped, tag = 'internal scratch']
  #allocation2 [shape = 'f32[16,18]{1,0:T(8,128)}', space=vmem, size = 0x2000, scoped, tag = 'scratch operand']
  %s0 = inlined_call_operand.vmem [shape: f32[2,8,18], index: 0, kind: input, shape index: {}]
  %s1 = inlined_call_operand.vmem [shape: f32[2,12,1], index: 1, kind: input, shape index: {}]
  %s2 = inlined_call_operand.vmem [shape: f32[3,16,8], index: 2, kind: input, shape index: {}]
  %s3 = inlined_call_operand.vmem [shape: f32[16,1], index: 3, kind: input, shape index: {}]
  %s4 = inlined_call_operand.vmem [shape: f32[16,1], index: 4, kind: input, shape index: {}]
  %s5 = inlined_call_operand.vmem [shape: f32[16,1], index: 5, kind: input, shape index: {}]
  %s6 = inlined_call_operand.vmem [shape: f32[3,16,16], index: 6, kind: input, shape index: {}]
  %s7 = inlined_call_operand.vmem [shape: f32[16,1], index: 7, kind: input, shape index: {}]
  %s8 = inlined_call_operand.vmem [shape: f32[16,1], index: 8, kind: input, shape index: {}]
  %s9 = inlined_call_operand.vmem [shape: f32[16,1], index: 9, kind: input, shape index: {}]
  %s10 = inlined_call_operand.vmem [shape: f32[32,12], index: 10, kind: input, shape index: {}]
  %s11 = inlined_call_operand.vmem [shape: f32[32,1], index: 11, kind: input, shape index: {}]
  %s12 = inlined_call_operand.vmem [shape: f32[16,8], index: 12, kind: input, shape index: {}]
  %s13 = inlined_call_operand.vmem [shape: f32[16,1], index: 13, kind: input, shape index: {}]
  %s14 = inlined_call_operand.hbm [shape: f32[2,16,16], index: 14, kind: output, shape index: {}]
  %s15 = sld [smem:[#allocation0]]
  $region89: #{tpu_custom_call.1} parent=0
    _
  %s17 = ssub.s32 1, %s15
  %s18 = scalar_select 0, %s17, %s15
  $region1: #{tpu_custom_call.1} parent=0
    #allocation3 [shape = 'u8[16384]{0}', space=vmem, size = 0x4000, scoped, tag = 'output window, operand 0']
    #allocation4 [shape = 's32[2]{0}', space=sflag, size = 0x8, scoped, tag = 'scoped memory for tpu_custom_call.1']
    %19 = vsyncpa [#allocation4], 0
    %s20 = scalar_lea.sflag [#allocation4], 1
    %21 = vsyncpa %s20, 0
    loop: start=0, step=1, limit=4
    $region2: #{tpu_custom_call.1} parent=1 // loop_pre_header
      _
    $region3: #{tpu_custom_call.1} parent=1 // loop_header
      %s23 = sphi 0, %s27
      %p24 = scmp.ge.s32.totalorder %s23, 4
      %s33 = sphi 0, %s35
      %s36 = sphi 0, %s33
      %s37 = sphi 0, %s36
      %s53 = sphi 0, %s37
      %s59 = sphi 0, %s61
      %s62 = sphi 0, %s59
      %s63 = sphi 0, %s62
      %s79 = sphi 0, %s63
      %s83 = sphi 0, %s83
      %s85 = sphi 0, %s83
      %s86 = sphi 0, %s85
      %s100 = sphi 0, %s86
      %s104 = sphi 0, %s104
      %s106 = sphi 0, %s104
      %s107 = sphi 0, %s106
      %s121 = sphi 0, %s107
      %s125 = sphi 0, %s125
      %s127 = sphi 0, %s125
      %s128 = sphi 0, %s127
      %s142 = sphi 0, %s128
      %s146 = sphi 0, %s146
      %s148 = sphi 0, %s146
      %s149 = sphi 0, %s148
      %s163 = sphi 0, %s149
      %s167 = sphi 0, %s167
      %s169 = sphi 0, %s167
      %s170 = sphi 0, %s169
      %s184 = sphi 0, %s170
      %s188 = sphi 0, %s188
      %s190 = sphi 0, %s188
      %s191 = sphi 0, %s190
      %s205 = sphi 0, %s191
      %s209 = sphi 0, %s209
      %s211 = sphi 0, %s209
      %s212 = sphi 0, %s211
      %s226 = sphi 0, %s212
      %s230 = sphi 0, %s230
      %s232 = sphi 0, %s230
      %s233 = sphi 0, %s232
      %s247 = sphi 0, %s233
      %s251 = sphi 0, %s251
      %s253 = sphi 0, %s251
      %s254 = sphi 0, %s253
      %s268 = sphi 0, %s254
      %s272 = sphi 0, %s272
      %s274 = sphi 0, %s272
      %s275 = sphi 0, %s274
      %s289 = sphi 0, %s275
      %s293 = sphi 0, %s293
      %s295 = sphi 0, %s293
      %s296 = sphi 0, %s295
      %s310 = sphi 0, %s296
      %s314 = sphi 0, %s314
      %s316 = sphi 0, %s314
      %s317 = sphi 0, %s316
      %s331 = sphi 0, %s317
      %s337 = sphi 0, %s339
      %s340 = sphi 0, %s337
      %s341 = sphi 0, %s340
      %s357 = sphi 0, %s341
    $region4: #{tpu_custom_call.1} parent=1 // loop_header_branch
      %26 = sbr.rel (%p24) target = $region8
    $region5: #{tpu_custom_call.1} parent=1 // loop_body
      %s28 = ssub.s32 %s23, 1
      %s29 = ssub.s32 %s23, 2
      %s30 = sadd.s32 %s23, 1
      %s31 = ssub.s32 %s23, %s30
      %p32 = scmp.eq.s32.totalorder %s31, 0
      %s34 = sadd.s32 %s33, 1
      %s35 = scalar_select %p32, %s33, %s34
      %p38 = pneg %p32
      %p39 = scmp.eq.s32.totalorder %s23, 1
      %p40 = por %p38, %p39
      %p41 = scmp.ne.s32.totalorder %s33, %s36
      %p42 = scmp.eq.s32.totalorder %s23, 0
      %p43 = por %p41, %p42
      %p44 = scmp.ne.s32.totalorder %s33, %s36
      %p45 = scmp.eq.s32.totalorder %s28, 1
      %p46 = por %p44, %p45
      %p47 = scmp.ne.s32.totalorder %s36, %s37
      %p48 = scmp.eq.s32.totalorder %s28, 0
      %p49 = por %p47, %p48
      %p50 = scmp.ne.s32.totalorder %s36, %s37
      %p51 = scmp.eq.s32.totalorder %s29, 1
      %p52 = por %p50, %p51
      %p54 = scmp.ne.s32.totalorder %s37, %s53
      %p55 = scmp.eq.s32.totalorder %s29, 0
      %p56 = por %p54, %p55
      %s57 = ssub.s32 %s23, %s30
      %p58 = scmp.eq.s32.totalorder %s57, 0
      %s60 = sadd.s32 %s59, 1
      %s61 = scalar_select %p58, %s59, %s60
      %p64 = pneg %p58
      %p65 = scmp.eq.s32.totalorder %s23, 1
      %p66 = por %p64, %p65
      %p67 = scmp.ne.s32.totalorder %s59, %s62
      %p68 = scmp.eq.s32.totalorder %s23, 0
      %p69 = por %p67, %p68
      %p70 = scmp.ne.s32.totalorder %s59, %s62
      %p71 = scmp.eq.s32.totalorder %s28, 1
      %p72 = por %p70, %p71
      %p73 = scmp.ne.s32.totalorder %s62, %s63
      %p74 = scmp.eq.s32.totalorder %s28, 0
      %p75 = por %p73, %p74
      %p76 = scmp.ne.s32.totalorder %s62, %s63
      %p77 = scmp.eq.s32.totalorder %s29, 1
      %p78 = por %p76, %p77
      %p80 = scmp.ne.s32.totalorder %s63, %s79
      %p81 = scmp.eq.s32.totalorder %s29, 0
      %p82 = por %p80, %p81
      %s84 = sadd.s32 %s83, 1
      %p87 = scmp.eq.s32.totalorder %s23, 1
      %p88 = scmp.ne.s32.totalorder %s83, %s85
      %p89 = scmp.eq.s32.totalorder %s23, 0
      %p90 = por %p88, %p89
      %p91 = scmp.ne.s32.totalorder %s83, %s85
      %p92 = scmp.eq.s32.totalorder %s28, 1
      %p93 = por %p91, %p92
      %p94 = scmp.ne.s32.totalorder %s85, %s86
      %p95 = scmp.eq.s32.totalorder %s28, 0
      %p96 = por %p94, %p95
      %p97 = scmp.ne.s32.totalorder %s85, %s86
      %p98 = scmp.eq.s32.totalorder %s29, 1
      %p99 = por %p97, %p98
      %p101 = scmp.ne.s32.totalorder %s86, %s100
      %p102 = scmp.eq.s32.totalorder %s29, 0
      %p103 = por %p101, %p102
      %s105 = sadd.s32 %s104, 1
      %p108 = scmp.eq.s32.totalorder %s23, 1
      %p109 = scmp.ne.s32.totalorder %s104, %s106
      %p110 = scmp.eq.s32.totalorder %s23, 0
      %p111 = por %p109, %p110
      %p112 = scmp.ne.s32.totalorder %s104, %s106
      %p113 = scmp.eq.s32.totalorder %s28, 1
      %p114 = por %p112, %p113
      %p115 = scmp.ne.s32.totalorder %s106, %s107
      %p116 = scmp.eq.s32.totalorder %s28, 0
      %p117 = por %p115, %p116
      %p118 = scmp.ne.s32.totalorder %s106, %s107
      %p119 = scmp.eq.s32.totalorder %s29, 1
      %p120 = por %p118, %p119
      %p122 = scmp.ne.s32.totalorder %s107, %s121
      %p123 = scmp.eq.s32.totalorder %s29, 0
      %p124 = por %p122, %p123
      %s126 = sadd.s32 %s125, 1
      %p129 = scmp.eq.s32.totalorder %s23, 1
      %p130 = scmp.ne.s32.totalorder %s125, %s127
      %p131 = scmp.eq.s32.totalorder %s23, 0
      %p132 = por %p130, %p131
      %p133 = scmp.ne.s32.totalorder %s125, %s127
      %p134 = scmp.eq.s32.totalorder %s28, 1
      %p135 = por %p133, %p134
      %p136 = scmp.ne.s32.totalorder %s127, %s128
      %p137 = scmp.eq.s32.totalorder %s28, 0
      %p138 = por %p136, %p137
      %p139 = scmp.ne.s32.totalorder %s127, %s128
      %p140 = scmp.eq.s32.totalorder %s29, 1
      %p141 = por %p139, %p140
      %p143 = scmp.ne.s32.totalorder %s128, %s142
      %p144 = scmp.eq.s32.totalorder %s29, 0
      %p145 = por %p143, %p144
      %s147 = sadd.s32 %s146, 1
      %p150 = scmp.eq.s32.totalorder %s23, 1
      %p151 = scmp.ne.s32.totalorder %s146, %s148
      %p152 = scmp.eq.s32.totalorder %s23, 0
      %p153 = por %p151, %p152
      %p154 = scmp.ne.s32.totalorder %s146, %s148
      %p155 = scmp.eq.s32.totalorder %s28, 1
      %p156 = por %p154, %p155
      %p157 = scmp.ne.s32.totalorder %s148, %s149
      %p158 = scmp.eq.s32.totalorder %s28, 0
      %p159 = por %p157, %p158
      %p160 = scmp.ne.s32.totalorder %s148, %s149
      %p161 = scmp.eq.s32.totalorder %s29, 1
      %p162 = por %p160, %p161
      %p164 = scmp.ne.s32.totalorder %s149, %s163
      %p165 = scmp.eq.s32.totalorder %s29, 0
      %p166 = por %p164, %p165
      %s168 = sadd.s32 %s167, 1
      %p171 = scmp.eq.s32.totalorder %s23, 1
      %p172 = scmp.ne.s32.totalorder %s167, %s169
      %p173 = scmp.eq.s32.totalorder %s23, 0
      %p174 = por %p172, %p173
      %p175 = scmp.ne.s32.totalorder %s167, %s169
      %p176 = scmp.eq.s32.totalorder %s28, 1
      %p177 = por %p175, %p176
      %p178 = scmp.ne.s32.totalorder %s169, %s170
      %p179 = scmp.eq.s32.totalorder %s28, 0
      %p180 = por %p178, %p179
      %p181 = scmp.ne.s32.totalorder %s169, %s170
      %p182 = scmp.eq.s32.totalorder %s29, 1
      %p183 = por %p181, %p182
      %p185 = scmp.ne.s32.totalorder %s170, %s184
      %p186 = scmp.eq.s32.totalorder %s29, 0
      %p187 = por %p185, %p186
      %s189 = sadd.s32 %s188, 1
      %p192 = scmp.eq.s32.totalorder %s23, 1
      %p193 = scmp.ne.s32.totalorder %s188, %s190
      %p194 = scmp.eq.s32.totalorder %s23, 0
      %p195 = por %p193, %p194
      %p196 = scmp.ne.s32.totalorder %s188, %s190
      %p197 = scmp.eq.s32.totalorder %s28, 1
      %p198 = por %p196, %p197
      %p199 = scmp.ne.s32.totalorder %s190, %s191
      %p200 = scmp.eq.s32.totalorder %s28, 0
      %p201 = por %p199, %p200
      %p202 = scmp.ne.s32.totalorder %s190, %s191
      %p203 = scmp.eq.s32.totalorder %s29, 1
      %p204 = por %p202, %p203
      %p206 = scmp.ne.s32.totalorder %s191, %s205
      %p207 = scmp.eq.s32.totalorder %s29, 0
      %p208 = por %p206, %p207
      %s210 = sadd.s32 %s209, 1
      %p213 = scmp.eq.s32.totalorder %s23, 1
      %p214 = scmp.ne.s32.totalorder %s209, %s211
      %p215 = scmp.eq.s32.totalorder %s23, 0
      %p216 = por %p214, %p215
      %p217 = scmp.ne.s32.totalorder %s209, %s211
      %p218 = scmp.eq.s32.totalorder %s28, 1
      %p219 = por %p217, %p218
      %p220 = scmp.ne.s32.totalorder %s211, %s212
      %p221 = scmp.eq.s32.totalorder %s28, 0
      %p222 = por %p220, %p221
      %p223 = scmp.ne.s32.totalorder %s211, %s212
      %p224 = scmp.eq.s32.totalorder %s29, 1
      %p225 = por %p223, %p224
      %p227 = scmp.ne.s32.totalorder %s212, %s226
      %p228 = scmp.eq.s32.totalorder %s29, 0
      %p229 = por %p227, %p228
      %s231 = sadd.s32 %s230, 1
      %p234 = scmp.eq.s32.totalorder %s23, 1
      %p235 = scmp.ne.s32.totalorder %s230, %s232
      %p236 = scmp.eq.s32.totalorder %s23, 0
      %p237 = por %p235, %p236
      %p238 = scmp.ne.s32.totalorder %s230, %s232
      %p239 = scmp.eq.s32.totalorder %s28, 1
      %p240 = por %p238, %p239
      %p241 = scmp.ne.s32.totalorder %s232, %s233
      %p242 = scmp.eq.s32.totalorder %s28, 0
      %p243 = por %p241, %p242
      %p244 = scmp.ne.s32.totalorder %s232, %s233
      %p245 = scmp.eq.s32.totalorder %s29, 1
      %p246 = por %p244, %p245
      %p248 = scmp.ne.s32.totalorder %s233, %s247
      %p249 = scmp.eq.s32.totalorder %s29, 0
      %p250 = por %p248, %p249
      %s252 = sadd.s32 %s251, 1
      %p255 = scmp.eq.s32.totalorder %s23, 1
      %p256 = scmp.ne.s32.totalorder %s251, %s253
      %p257 = scmp.eq.s32.totalorder %s23, 0
      %p258 = por %p256, %p257
      %p259 = scmp.ne.s32.totalorder %s251, %s253
      %p260 = scmp.eq.s32.totalorder %s28, 1
      %p261 = por %p259, %p260
      %p262 = scmp.ne.s32.totalorder %s253, %s254
      %p263 = scmp.eq.s32.totalorder %s28, 0
      %p264 = por %p262, %p263
      %p265 = scmp.ne.s32.totalorder %s253, %s254
      %p266 = scmp.eq.s32.totalorder %s29, 1
      %p267 = por %p265, %p266
      %p269 = scmp.ne.s32.totalorder %s254, %s268
      %p270 = scmp.eq.s32.totalorder %s29, 0
      %p271 = por %p269, %p270
      %s273 = sadd.s32 %s272, 1
      %p276 = scmp.eq.s32.totalorder %s23, 1
      %p277 = scmp.ne.s32.totalorder %s272, %s274
      %p278 = scmp.eq.s32.totalorder %s23, 0
      %p279 = por %p277, %p278
      %p280 = scmp.ne.s32.totalorder %s272, %s274
      %p281 = scmp.eq.s32.totalorder %s28, 1
      %p282 = por %p280, %p281
      %p283 = scmp.ne.s32.totalorder %s274, %s275
      %p284 = scmp.eq.s32.totalorder %s28, 0
      %p285 = por %p283, %p284
      %p286 = scmp.ne.s32.totalorder %s274, %s275
      %p287 = scmp.eq.s32.totalorder %s29, 1
      %p288 = por %p286, %p287
      %p290 = scmp.ne.s32.totalorder %s275, %s289
      %p291 = scmp.eq.s32.totalorder %s29, 0
      %p292 = por %p290, %p291
      %s294 = sadd.s32 %s293, 1
      %p297 = scmp.eq.s32.totalorder %s23, 1
      %p298 = scmp.ne.s32.totalorder %s293, %s295
      %p299 = scmp.eq.s32.totalorder %s23, 0
      %p300 = por %p298, %p299
      %p301 = scmp.ne.s32.totalorder %s293, %s295
      %p302 = scmp.eq.s32.totalorder %s28, 1
      %p303 = por %p301, %p302
      %p304 = scmp.ne.s32.totalorder %s295, %s296
      %p305 = scmp.eq.s32.totalorder %s28, 0
      %p306 = por %p304, %p305
      %p307 = scmp.ne.s32.totalorder %s295, %s296
      %p308 = scmp.eq.s32.totalorder %s29, 1
      %p309 = por %p307, %p308
      %p311 = scmp.ne.s32.totalorder %s296, %s310
      %p312 = scmp.eq.s32.totalorder %s29, 0
      %p313 = por %p311, %p312
      %s315 = sadd.s32 %s314, 1
      %p318 = scmp.eq.s32.totalorder %s23, 1
      %p319 = scmp.ne.s32.totalorder %s314, %s316
      %p320 = scmp.eq.s32.totalorder %s23, 0
      %p321 = por %p319, %p320
      %p322 = scmp.ne.s32.totalorder %s314, %s316
      %p323 = scmp.eq.s32.totalorder %s28, 1
      %p324 = por %p322, %p323
      %p325 = scmp.ne.s32.totalorder %s316, %s317
      %p326 = scmp.eq.s32.totalorder %s28, 0
      %p327 = por %p325, %p326
      %p328 = scmp.ne.s32.totalorder %s316, %s317
      %p329 = scmp.eq.s32.totalorder %s29, 1
      %p330 = por %p328, %p329
      %p332 = scmp.ne.s32.totalorder %s317, %s331
      %p333 = scmp.eq.s32.totalorder %s29, 0
      %p334 = por %p332, %p333
      %s335 = ssub.s32 %s23, %s30
      %p336 = scmp.eq.s32.totalorder %s335, 0
      %s338 = sadd.s32 %s337, 1
      %s339 = scalar_select %p336, %s337, %s338
      %p342 = pneg %p336
      %p343 = scmp.eq.s32.totalorder %s23, 1
      %p344 = por %p342, %p343
      %p345 = scmp.ne.s32.totalorder %s337, %s340
      %p346 = scmp.eq.s32.totalorder %s23, 0
      %p347 = por %p345, %p346
      %p348 = scmp.ne.s32.totalorder %s337, %s340
      %p349 = scmp.eq.s32.totalorder %s28, 1
      %p350 = por %p348, %p349
      %p351 = scmp.ne.s32.totalorder %s340, %s341
      %p352 = scmp.eq.s32.totalorder %s28, 0
      %p353 = por %p351, %p352
      %p354 = scmp.ne.s32.totalorder %s340, %s341
      %p355 = scmp.eq.s32.totalorder %s29, 1
      %p356 = por %p354, %p355
      %p358 = scmp.ne.s32.totalorder %s341, %s357
      %p359 = scmp.eq.s32.totalorder %s29, 0
      %p360 = por %p358, %p359
      %p361 = scmp.le.s32.totalorder 1, %s23
      %p362 = scmp.lt.s32.totalorder %s23, 3
      %p363 = pnand %p361, %p362
      %p364 = pneg %p363
      // Predicated region
      $region9: #{tpu_custom_call.1} parent=5 // pred_check
        _
      $region10: #{tpu_custom_call.1} parent=5 // pred_check_branch
        %366 = sbr.rel (%p363) target = $region12
      $region11: #{tpu_custom_call.1} parent=5 // pred_region
        %s367 = ssub.s32 %s23, 1
        // Predicated region
        $region13: #{tpu_custom_call.1} parent=11 // pred_check
          %p368 = pneg %p96
        $region14: #{tpu_custom_call.1} parent=11 // pred_check_branch
          %370 = sbr.rel (%p368) target = $region16
        $region15: #{tpu_custom_call.1} parent=11 // pred_region
          _
        $region16: #{tpu_custom_call.1} parent=11 // pred_fallthru
          _
        // Predicated region
        $region17: #{tpu_custom_call.1} parent=11 // pred_check
          %p371 = pneg %p117
        $region18: #{tpu_custom_call.1} parent=11 // pred_check_branch
          %373 = sbr.rel (%p371) target = $region20
        $region19: #{tpu_custom_call.1} parent=11 // pred_region
          _
        $region20: #{tpu_custom_call.1} parent=11 // pred_fallthru
          _
        // Predicated region
        $region21: #{tpu_custom_call.1} parent=11 // pred_check
          %p374 = pneg %p138
        $region22: #{tpu_custom_call.1} parent=11 // pred_check_branch
          %376 = sbr.rel (%p374) target = $region24
        $region23: #{tpu_custom_call.1} parent=11 // pred_region
          _
        $region24: #{tpu_custom_call.1} parent=11 // pred_fallthru
          _
        // Predicated region
        $region25: #{tpu_custom_call.1} parent=11 // pred_check
          %p377 = pneg %p159
        $region26: #{tpu_custom_call.1} parent=11 // pred_check_branch
          %379 = sbr.rel (%p377) target = $region28
        $region27: #{tpu_custom_call.1} parent=11 // pred_region
          _
        $region28: #{tpu_custom_call.1} parent=11 // pred_fallthru
          _
        // Predicated region
        $region29: #{tpu_custom_call.1} parent=11 // pred_check
          %p380 = pneg %p180
        $region30: #{tpu_custom_call.1} parent=11 // pred_check_branch
          %382 = sbr.rel (%p380) target = $region32
        $region31: #{tpu_custom_call.1} parent=11 // pred_region
          _
        $region32: #{tpu_custom_call.1} parent=11 // pred_fallthru
          _
        // Predicated region
        $region33: #{tpu_custom_call.1} parent=11 // pred_check
          %p383 = pneg %p201
        $region34: #{tpu_custom_call.1} parent=11 // pred_check_branch
          %385 = sbr.rel (%p383) target = $region36
        $region35: #{tpu_custom_call.1} parent=11 // pred_region
          _
        $region36: #{tpu_custom_call.1} parent=11 // pred_fallthru
          _
        // Predicated region
        $region37: #{tpu_custom_call.1} parent=11 // pred_check
          %p386 = pneg %p222
        $region38: #{tpu_custom_call.1} parent=11 // pred_check_branch
          %388 = sbr.rel (%p386) target = $region40
        $region39: #{tpu_custom_call.1} parent=11 // pred_region
          _
        $region40: #{tpu_custom_call.1} parent=11 // pred_fallthru
          _
        // Predicated region
        $region41: #{tpu_custom_call.1} parent=11 // pred_check
          %p389 = pneg %p243
        $region42: #{tpu_custom_call.1} parent=11 // pred_check_branch
          %391 = sbr.rel (%p389) target = $region44
        $region43: #{tpu_custom_call.1} parent=11 // pred_region
          _
        $region44: #{tpu_custom_call.1} parent=11 // pred_fallthru
          _
        // Predicated region
        $region45: #{tpu_custom_call.1} parent=11 // pred_check
          %p392 = pneg %p264
        $region46: #{tpu_custom_call.1} parent=11 // pred_check_branch
          %394 = sbr.rel (%p392) target = $region48
        $region47: #{tpu_custom_call.1} parent=11 // pred_region
          _
        $region48: #{tpu_custom_call.1} parent=11 // pred_fallthru
          _
        // Predicated region
        $region49: #{tpu_custom_call.1} parent=11 // pred_check
          %p395 = pneg %p285
        $region50: #{tpu_custom_call.1} parent=11 // pred_check_branch
          %397 = sbr.rel (%p395) target = $region52
        $region51: #{tpu_custom_call.1} parent=11 // pred_region
          _
        $region52: #{tpu_custom_call.1} parent=11 // pred_fallthru
          _
        // Predicated region
        $region53: #{tpu_custom_call.1} parent=11 // pred_check
          %p398 = pneg %p306
        $region54: #{tpu_custom_call.1} parent=11 // pred_check_branch
          %400 = sbr.rel (%p398) target = $region56
        $region55: #{tpu_custom_call.1} parent=11 // pred_region
          _
        $region56: #{tpu_custom_call.1} parent=11 // pred_fallthru
          _
        // Predicated region
        $region57: #{tpu_custom_call.1} parent=11 // pred_check
          %p401 = pneg %p327
        $region58: #{tpu_custom_call.1} parent=11 // pred_check_branch
          %403 = sbr.rel (%p401) target = $region60
        $region59: #{tpu_custom_call.1} parent=11 // pred_region
          _
        $region60: #{tpu_custom_call.1} parent=11 // pred_fallthru
          _
      $region12: #{tpu_custom_call.1} parent=5 // pred_fallthru
        _
      %p404 = scmp.lt.s32.totalorder %s23, 2
      // Predicated region
      $region61: #{tpu_custom_call.1} parent=5 // pred_check
        %p405 = pneg %p404
      $region62: #{tpu_custom_call.1} parent=5 // pred_check_branch
        %407 = sbr.rel (%p405) target = $region64
      $region63: #{tpu_custom_call.1} parent=5 // pred_region
        // Predicated region
        $region65: #{tpu_custom_call.1} parent=63 // pred_check
          %p408 = pneg %p43
        $region66: #{tpu_custom_call.1} parent=63 // pred_check_branch
          %410 = sbr.rel (%p408) target = $region68
        $region67: #{tpu_custom_call.1} parent=63 // pred_region
          %p411 = scmp.lt.s32.totalorder %s23, 1
          %s412 = scalar_select %p411, %s23, 1
          %s413 = smul.addr %s412, 8
          %s414 = scalar_lea.vmem %s0, %s413
        $region68: #{tpu_custom_call.1} parent=63 // pred_fallthru
          _
        // Predicated region
        $region69: #{tpu_custom_call.1} parent=63 // pred_check
          %p415 = pneg %p69
        $region70: #{tpu_custom_call.1} parent=63 // pred_check_branch
          %417 = sbr.rel (%p415) target = $region72
        $region71: #{tpu_custom_call.1} parent=63 // pred_region
          %p418 = scmp.lt.s32.totalorder %s23, 1
          %s419 = scalar_select %p418, %s23, 1
          %s420 = smul.addr %s419, 2
          %s421 = smul.addr %s420, 8
          %s422 = scalar_lea.vmem %s1, %s421
        $region72: #{tpu_custom_call.1} parent=63 // pred_fallthru
          _
      $region64: #{tpu_custom_call.1} parent=5 // pred_fallthru
        _
      %p423 = scmp.le.s32.totalorder 1, %s23
      %p424 = scmp.lt.s32.totalorder %s23, 3
      %p425 = pnand %p423, %p424
      %p426 = pneg %p425
      // Predicated region
      $region73: #{tpu_custom_call.1} parent=5 // pred_check
        _
      $region74: #{tpu_custom_call.1} parent=5 // pred_check_branch
        %428 = sbr.rel (%p425) target = $region76
      $region75: #{tpu_custom_call.1} parent=5 // pred_region
        %s429 = ssub.s32 %s23, 1
        %p430 = scmp.lt.s32.totalorder %s28, 1
        %s431 = scalar_select %p430, %s28, 1
        %s432 = smul.addr %s431, 8
        %s433 = scalar_lea.vmem %s0, %s432
        %p434 = pneg %p49
        %p435 = pneg %p46
        %p436 = scmp.lt.s32.totalorder %s28, 1
        %s437 = scalar_select %p436, %s28, 1
        %s438 = smul.addr %s437, 2
        %s439 = smul.addr %s438, 8
        %s440 = scalar_lea.vmem %s1, %s439
        %p441 = pneg %p75
        %p442 = pneg %p72
        %p443 = pneg %p96
        %p444 = pneg %p93
        %p445 = pneg %p117
        %p446 = pneg %p114
        %p447 = pneg %p138
        %p448 = pneg %p135
        %p449 = pneg %p159
        %p450 = pneg %p156
        %p451 = pneg %p180
        %p452 = pneg %p177
        %p453 = pneg %p201
        %p454 = pneg %p198
        %p455 = pneg %p222
        %p456 = pneg %p219
        %p457 = pneg %p243
        %p458 = pneg %p240
        %p459 = pneg %p264
        %p460 = pneg %p261
        %p461 = pneg %p285
        %p462 = pneg %p282
        %p463 = pneg %p306
        %p464 = pneg %p303
        %p465 = pneg %p327
        %p466 = pneg %p324
        %p467 = pneg %p353
        %p468 = pneg %p350
        %s469 = sand.u32 %s340, 1
        %s470 = scalar_lea.sflag [#allocation4], %s469
        %s471 = sand.u32 %s340, 1
        %s472 = smul.addr %s471, 16
        %s473 = scalar_lea.vmem [#allocation3], %s472
        %p474 = scmp.lt.s32.totalorder %s28, 1
        %s475 = scalar_select %p474, %s28, 1
        %s476 = smul.addr %s475, 8
        %s477 = scalar_lea.vmem %s0, %s476
        %p478 = scmp.lt.s32.totalorder %s28, 1
        %s479 = scalar_select %p478, %s28, 1
        %s480 = smul.addr %s479, 2
        %s481 = smul.addr %s480, 8
        %s482 = scalar_lea.vmem %s1, %s481
        %v483 = vld [vmem:[%s482] sm:$0xff]
        %v484 = vld [vmem:[%s482 + $0x8] sm:$0xf]
        %v485 = vmax.f32 %v483, 0.0
        %v486 = vmax.f32 %v484, 0.0
        %v487 = vand.u32 2147483647, %v483
        %v488 = vand.u32 2147483647, %v484
        %v489 = vsub.f32 0.0, %v487
        %v490 = vsub.f32 0.0, %v488
        %v491 = vmul.f32 %v489, 1.442695
        %v492 = vpow.pop %v491
        %v493 = vmul.f32 %v490, 1.442695
        %v494 = vpow.pop %v493
        %v495 = vadd.f32 %v492, 1.0
        %v496 = vadd.f32 %v494, 1.0
        %v497 = vlog2.pop %v495
        %v498 = vmul.f32 %v497, 0.6931472
        %v499 = vlog2.pop %v496
        %v500 = vmul.f32 %v499, 0.6931472
        %v501 = vadd.f32 %v485, %v498
        %v502 = vadd.f32 %v486, %v500
        %v503 = vtanh.pop %v501
        %v504 = vtanh.pop %v502
        %v505 = vmul.f32 %v483, %v503
        %v506 = vmul.f32 %v484, %v504
        %v507 = vld [vmem:[%s10] sm:$0xff]
        %v508 = vld [vmem:[%s10 + $0x8] sm:$0xff]
        %v509 = vld [vmem:[%s10 + $0x10] sm:$0xff]
        %v510 = vld [vmem:[%s10 + $0x18] sm:$0xff]
        %v511 = vld [vmem:[%s11] sm:$0xff]
        %v512 = vld [vmem:[%s11 + $0x8] sm:$0xff]
        %v513 = vld [vmem:[%s11 + $0x10] sm:$0xff]
        %v514 = vld [vmem:[%s11 + $0x18] sm:$0xff]
        %vm515 = vcmask 97280
        %v517 = vsel %vm515, %v507, 0
        %v520 = vsel %vm515, %v508, 0
        %v523 = vsel %vm515, %v509, 0
        %v526 = vsel %vm515, %v510, 0
        %vm528 = vcmask 1043456
        %v530 = vsel %vm528, %v506, 0
        %532 = vmatprep.subr.mxu0 0.0
        %533 = vmatpush1.msra.mxu0 %v505
        %534 = vmatprep.subr.mxu0 0.0
        %535 = vmatpush1.msra.mxu0 %v530
        %536 = vmatprep.subr.mxu0 0.0
        %537 = vmatpush1.msra.mxu0 0.0
        %538 = vmatprep.subr.mxu0 0.0
        %539 = vmatpush1.msra.mxu0 0.0
        %540 = vmatprep.subr.mxu0 0.0
        %541 = vmatpush1.msra.mxu0 0.0
        %542 = vmatprep.subr.mxu0 0.0
        %543 = vmatpush1.msra.mxu0 0.0
        %544 = vmatprep.subr.mxu0 0.0
        %545 = vmatpush1.msra.mxu0 0.0
        %546 = vmatprep.subr.mxu0 0.0
        %547 = vmatpush1.msra.mxu0 0.0
        %548 = vmatprep.subr.mxu0 0.0
        %549 = vmatpush1.msra.mxu0 0.0
        %550 = vmatprep.subr.mxu0 0.0
        %551 = vmatpush1.msra.mxu0 0.0
        %552 = vmatprep.subr.mxu0 0.0
        %553 = vmatpush1.msra.mxu0 0.0
        %554 = vmatprep.subr.mxu0 0.0
        %555 = vmatpush1.msra.mxu0 0.0
        %556 = vmatprep.subr.mxu0 0.0
        %557 = vmatpush1.msra.mxu0 0.0
        %558 = vmatprep.subr.mxu0 0.0
        %559 = vmatpush1.msra.mxu0 0.0
        %560 = vmatprep.subr.mxu0 0.0
        %561 = vmatpush1.msra.mxu0 0.0
        %562 = vmatprep.subr.mxu0 0.0
        %563 = vmatpush1.msra.mxu0 0.0
        %564 = vmatprep.subr.mxu0 0.0
        %565 = vmatpush1.msra.mxu0 0.0
        %566 = vmatprep.subr.mxu0 0.0
        %567 = vmatpush1.msra.mxu0 0.0
        %568 = vmatprep.subr.mxu0 0.0
        %569 = vmatpush1.msra.mxu0 0.0
        %570 = vmatprep.subr.mxu0 0.0
        %571 = vmatpush1.msra.mxu0 0.0
        %572 = vmatprep.subr.mxu0 0.0
        %573 = vmatpush1.msra.mxu0 0.0
        %574 = vmatprep.subr.mxu0 0.0
        %575 = vmatpush1.msra.mxu0 0.0
        %576 = vmatprep.subr.mxu0 0.0
        %577 = vmatpush1.msra.mxu0 0.0
        %578 = vmatprep.subr.mxu0 0.0
        %579 = vmatpush1.msra.mxu0 0.0
        %580 = vmatprep.subr.mxu0 0.0
        %581 = vmatpush1.msra.mxu0 0.0
        %582 = vmatprep.subr.mxu0 0.0
        %583 = vmatpush1.msra.mxu0 0.0
        %584 = vmatprep.subr.mxu0 0.0
        %585 = vmatpush1.msra.mxu0 0.0
        %586 = vmatprep.subr.mxu0 0.0
        %587 = vmatpush1.msra.mxu0 0.0
        %588 = vmatprep.subr.mxu0 0.0
        %589 = vmatpush1.msra.mxu0 0.0
        %590 = vmatprep.subr.mxu0 0.0
        %591 = vmatpush1.msra.mxu0 0.0
        %592 = vmatprep.subr.mxu0 0.0
        %593 = vmatpush1.msra.mxu0 0.0
        %594 = vmatprep.subr.mxu0 0.0
        %595 = vmatpush1.msra.mxu0 0.0
        %596 = vmatprep.mubr.f32.mxu0 0.0
        %597 = vmatmul.mubr.f32.gmra.mrb[0].mxu0 %v517
        %v598 = vpop.f32.mrb[0].mxu0
        %v599 = vadd.f32 %v511, %v598
        %v600 = vpop.f32.mrb[0].mxu0
        %601 = vmatprep.mubr.f32.mxu0 0.0
        %602 = vmatmul.mubr.f32.gmra.mrb[0].mxu0 %v520
        %v603 = vpop.f32.mrb[0].mxu0
        %v604 = vadd.f32 %v512, %v603
        %v605 = vpop.f32.mrb[0].mxu0
        %606 = vmatprep.mubr.f32.mxu0 0.0
        %607 = vmatmul.mubr.f32.gmra.mrb[0].mxu0 %v523
        %v608 = vpop.f32.mrb[0].mxu0
        %v609 = vadd.f32 %v513, %v608
        %v610 = vpop.f32.mrb[0].mxu0
        %611 = vmatprep.mubr.f32.mxu0 0.0
        %612 = vmatmul.mubr.f32.gmra.mrb[0].mxu0 %v526
        %v613 = vpop.f32.mrb[0].mxu0
        %v614 = vadd.f32 %v514, %v613
        %v615 = vpop.f32.mrb[0].mxu0
        %616 = vdwg.mxu0
        %v617 = vld [vmem:[%s477] sm:$0xff]
        %v618 = vld [vmem:[%s2] sm:$0xff]
        %v619 = vld [vmem:[%s2 + $0x8] sm:$0xff]
        %s620 = scalar_lea.vmem %s2, 16
        %v621 = vld [vmem:[%s620] sm:$0xff]
        %v622 = vld [vmem:[%s620 + $0x8] sm:$0xff]
        %624 = vrot.lane.b32.xlu0 %v617, 127
        %v625 = vpop.permute.xlu0 %624
        %vm627 = vcmask 64512
        %v629 = vsel %vm627, %v621, 0
        %v632 = vsel %vm627, %v622, 0
        %634 = vmatprep.subr.mxu0 0.0
        %635 = vmatpush1.msra.mxu0 %v625
        %636 = vmatprep.subr.mxu0 0.0
        %637 = vmatpush1.msra.mxu0 0.0
        %638 = vmatprep.subr.mxu0 0.0
        %639 = vmatpush1.msra.mxu0 0.0
        %640 = vmatprep.subr.mxu0 0.0
        %641 = vmatpush1.msra.mxu0 0.0
        %642 = vmatprep.subr.mxu0 0.0
        %643 = vmatpush1.msra.mxu0 0.0
        %644 = vmatprep.subr.mxu0 0.0
        %645 = vmatpush1.msra.mxu0 0.0
        %646 = vmatprep.subr.mxu0 0.0
        %647 = vmatpush1.msra.mxu0 0.0
        %648 = vmatprep.subr.mxu0 0.0
        %649 = vmatpush1.msra.mxu0 0.0
        %650 = vmatprep.subr.mxu0 0.0
        %651 = vmatpush1.msra.mxu0 0.0
        %652 = vmatprep.subr.mxu0 0.0
        %653 = vmatpush1.msra.mxu0 0.0
        %654 = vmatprep.subr.mxu0 0.0
        %655 = vmatpush1.msra.mxu0 0.0
        %656 = vmatprep.subr.mxu0 0.0
        %657 = vmatpush1.msra.mxu0 0.0
        %658 = vmatprep.subr.mxu0 0.0
        %659 = vmatpush1.msra.mxu0 0.0
        %660 = vmatprep.subr.mxu0 0.0
        %661 = vmatpush1.msra.mxu0 0.0
        %662 = vmatprep.subr.mxu0 0.0
        %663 = vmatpush1.msra.mxu0 0.0
        %664 = vmatprep.subr.mxu0 0.0
        %665 = vmatpush1.msra.mxu0 0.0
        %666 = vmatprep.subr.mxu0 0.0
        %667 = vmatpush1.msra.mxu0 0.0
        %668 = vmatprep.subr.mxu0 0.0
        %669 = vmatpush1.msra.mxu0 0.0
        %670 = vmatprep.subr.mxu0 0.0
        %671 = vmatpush1.msra.mxu0 0.0
        %672 = vmatprep.subr.mxu0 0.0
        %673 = vmatpush1.msra.mxu0 0.0
        %674 = vmatprep.subr.mxu0 0.0
        %675 = vmatpush1.msra.mxu0 0.0
        %676 = vmatprep.subr.mxu0 0.0
        %677 = vmatpush1.msra.mxu0 0.0
        %678 = vmatprep.subr.mxu0 0.0
        %679 = vmatpush1.msra.mxu0 0.0
        %680 = vmatprep.subr.mxu0 0.0
        %681 = vmatpush1.msra.mxu0 0.0
        %682 = vmatprep.subr.mxu0 0.0
        %683 = vmatpush1.msra.mxu0 0.0
        %684 = vmatprep.subr.mxu0 0.0
        %685 = vmatpush1.msra.mxu0 0.0
        %686 = vmatprep.subr.mxu0 0.0
        %687 = vmatpush1.msra.mxu0 0.0
        %688 = vmatprep.subr.mxu0 0.0
        %689 = vmatpush1.msra.mxu0 0.0
        %690 = vmatprep.subr.mxu0 0.0
        %691 = vmatpush1.msra.mxu0 0.0
        %692 = vmatprep.subr.mxu0 0.0
        %693 = vmatpush1.msra.mxu0 0.0
        %694 = vmatprep.subr.mxu0 0.0
        %695 = vmatpush1.msra.mxu0 0.0
        %696 = vmatprep.subr.mxu0 0.0
        %697 = vmatpush1.msra.mxu0 0.0
        %698 = vmatprep.mubr.f32.mxu0 0.0
        %699 = vmatmul.mubr.f32.gmra.mrb[0].mxu0 %v629
        %v700 = vpop.f32.mrb[0].mxu0
        %v701 = vadd.f32 0.0, %v700
        %v702 = vpop.f32.mrb[0].mxu0
        %703 = vmatprep.mubr.f32.mxu0 0.0
        %704 = vmatmul.mubr.f32.gmra.mrb[0].mxu0 %v632
        %v705 = vpop.f32.mrb[0].mxu0
        %v706 = vadd.f32 0.0, %v705
        %v707 = vpop.f32.mrb[0].mxu0
        %708 = vdwg.mxu0
        %v710 = vsel %vm627, %v618, 0
        %v713 = vsel %vm627, %v619, 0
        %715 = vmatprep.subr.mxu0 0.0
        %716 = vmatpush1.msra.mxu0 %v617
        %717 = vmatprep.subr.mxu0 0.0
        %718 = vmatpush1.msra.mxu0 0.0
        %719 = vmatprep.subr.mxu0 0.0
        %720 = vmatpush1.msra.mxu0 0.0
        %721 = vmatprep.subr.mxu0 0.0
        %722 = vmatpush1.msra.mxu0 0.0
        %723 = vmatprep.subr.mxu0 0.0
        %724 = vmatpush1.msra.mxu0 0.0
        %725 = vmatprep.subr.mxu0 0.0
        %726 = vmatpush1.msra.mxu0 0.0
        %727 = vmatprep.subr.mxu0 0.0
        %728 = vmatpush1.msra.mxu0 0.0
        %729 = vmatprep.subr.mxu0 0.0
        %730 = vmatpush1.msra.mxu0 0.0
        %731 = vmatprep.subr.mxu0 0.0
        %732 = vmatpush1.msra.mxu0 0.0
        %733 = vmatprep.subr.mxu0 0.0
        %734 = vmatpush1.msra.mxu0 0.0
        %735 = vmatprep.subr.mxu0 0.0
        %736 = vmatpush1.msra.mxu0 0.0
        %737 = vmatprep.subr.mxu0 0.0
        %738 = vmatpush1.msra.mxu0 0.0
        %739 = vmatprep.subr.mxu0 0.0
        %740 = vmatpush1.msra.mxu0 0.0
        %741 = vmatprep.subr.mxu0 0.0
        %742 = vmatpush1.msra.mxu0 0.0
        %743 = vmatprep.subr.mxu0 0.0
        %744 = vmatpush1.msra.mxu0 0.0
        %745 = vmatprep.subr.mxu0 0.0
        %746 = vmatpush1.msra.mxu0 0.0
        %747 = vmatprep.subr.mxu0 0.0
        %748 = vmatpush1.msra.mxu0 0.0
        %749 = vmatprep.subr.mxu0 0.0
        %750 = vmatpush1.msra.mxu0 0.0
        %751 = vmatprep.subr.mxu0 0.0
        %752 = vmatpush1.msra.mxu0 0.0
        %753 = vmatprep.subr.mxu0 0.0
        %754 = vmatpush1.msra.mxu0 0.0
        %755 = vmatprep.subr.mxu0 0.0
        %756 = vmatpush1.msra.mxu0 0.0
        %757 = vmatprep.subr.mxu0 0.0
        %758 = vmatpush1.msra.mxu0 0.0
        %759 = vmatprep.subr.mxu0 0.0
        %760 = vmatpush1.msra.mxu0 0.0
        %761 = vmatprep.subr.mxu0 0.0
        %762 = vmatpush1.msra.mxu0 0.0
        %763 = vmatprep.subr.mxu0 0.0
        %764 = vmatpush1.msra.mxu0 0.0
        %765 = vmatprep.subr.mxu0 0.0
        %766 = vmatpush1.msra.mxu0 0.0
        %767 = vmatprep.subr.mxu0 0.0
        %768 = vmatpush1.msra.mxu0 0.0
        %769 = vmatprep.subr.mxu0 0.0
        %770 = vmatpush1.msra.mxu0 0.0
        %771 = vmatprep.subr.mxu0 0.0
        %772 = vmatpush1.msra.mxu0 0.0
        %773 = vmatprep.subr.mxu0 0.0
        %774 = vmatpush1.msra.mxu0 0.0
        %775 = vmatprep.subr.mxu0 0.0
        %776 = vmatpush1.msra.mxu0 0.0
        %777 = vmatprep.subr.mxu0 0.0
        %778 = vmatpush1.msra.mxu0 0.0
        %779 = vmatprep.mubr.f32.mxu0 0.0
        %780 = vmatmul.mubr.f32.gmra.mrb[0].mxu0 %v710
        %v781 = vpop.f32.mrb[0].mxu0
        %v782 = vadd.f32 %v701, %v781
        %v783 = vpop.f32.mrb[0].mxu0
        %784 = vmatprep.mubr.f32.mxu0 0.0
        %785 = vmatmul.mubr.f32.gmra.mrb[0].mxu0 %v713
        %v786 = vpop.f32.mrb[0].mxu0
        %v787 = vadd.f32 %v706, %v786
        %v788 = vpop.f32.mrb[0].mxu0
        %789 = vdwg.mxu0
        %s790 = scalar_lea.vmem %s2, 32
        %v791 = vld [vmem:[%s790] sm:$0xff]
        %v792 = vld [vmem:[%s790 + $0x8] sm:$0xff]
        %793 = vrot.lane.b32.xlu0 %v617, 126
        %v794 = vpop.permute.xlu0 %793
        %v797 = vsel %vm627, %v791, 0
        %v800 = vsel %vm627, %v792, 0
        %802 = vmatprep.subr.mxu0 0.0
        %803 = vmatpush1.msra.mxu0 %v794
        %804 = vmatprep.subr.mxu0 0.0
        %805 = vmatpush1.msra.mxu0 0.0
        %806 = vmatprep.subr.mxu0 0.0
        %807 = vmatpush1.msra.mxu0 0.0
        %808 = vmatprep.subr.mxu0 0.0
        %809 = vmatpush1.msra.mxu0 0.0
        %810 = vmatprep.subr.mxu0 0.0
        %811 = vmatpush1.msra.mxu0 0.0
        %812 = vmatprep.subr.mxu0 0.0
        %813 = vmatpush1.msra.mxu0 0.0
        %814 = vmatprep.subr.mxu0 0.0
        %815 = vmatpush1.msra.mxu0 0.0
        %816 = vmatprep.subr.mxu0 0.0
        %817 = vmatpush1.msra.mxu0 0.0
        %818 = vmatprep.subr.mxu0 0.0
        %819 = vmatpush1.msra.mxu0 0.0
        %820 = vmatprep.subr.mxu0 0.0
        %821 = vmatpush1.msra.mxu0 0.0
        %822 = vmatprep.subr.mxu0 0.0
        %823 = vmatpush1.msra.mxu0 0.0
        %824 = vmatprep.subr.mxu0 0.0
        %825 = vmatpush1.msra.mxu0 0.0
        %826 = vmatprep.subr.mxu0 0.0
        %827 = vmatpush1.msra.mxu0 0.0
        %828 = vmatprep.subr.mxu0 0.0
        %829 = vmatpush1.msra.mxu0 0.0
        %830 = vmatprep.subr.mxu0 0.0
        %831 = vmatpush1.msra.mxu0 0.0
        %832 = vmatprep.subr.mxu0 0.0
        %833 = vmatpush1.msra.mxu0 0.0
        %834 = vmatprep.subr.mxu0 0.0
        %835 = vmatpush1.msra.mxu0 0.0
        %836 = vmatprep.subr.mxu0 0.0
        %837 = vmatpush1.msra.mxu0 0.0
        %838 = vmatprep.subr.mxu0 0.0
        %839 = vmatpush1.msra.mxu0 0.0
        %840 = vmatprep.subr.mxu0 0.0
        %841 = vmatpush1.msra.mxu0 0.0
        %842 = vmatprep.subr.mxu0 0.0
        %843 = vmatpush1.msra.mxu0 0.0
        %844 = vmatprep.subr.mxu0 0.0
        %845 = vmatpush1.msra.mxu0 0.0
        %846 = vmatprep.subr.mxu0 0.0
        %847 = vmatpush1.msra.mxu0 0.0
        %848 = vmatprep.subr.mxu0 0.0
        %849 = vmatpush1.msra.mxu0 0.0
        %850 = vmatprep.subr.mxu0 0.0
        %851 = vmatpush1.msra.mxu0 0.0
        %852 = vmatprep.subr.mxu0 0.0
        %853 = vmatpush1.msra.mxu0 0.0
        %854 = vmatprep.subr.mxu0 0.0
        %855 = vmatpush1.msra.mxu0 0.0
        %856 = vmatprep.subr.mxu0 0.0
        %857 = vmatpush1.msra.mxu0 0.0
        %858 = vmatprep.subr.mxu0 0.0
        %859 = vmatpush1.msra.mxu0 0.0
        %860 = vmatprep.subr.mxu0 0.0
        %861 = vmatpush1.msra.mxu0 0.0
        %862 = vmatprep.subr.mxu0 0.0
        %863 = vmatpush1.msra.mxu0 0.0
        %864 = vmatprep.subr.mxu0 0.0
        %865 = vmatpush1.msra.mxu0 0.0
        %866 = vmatprep.mubr.f32.mxu0 0.0
        %867 = vmatmul.mubr.f32.gmra.mrb[0].mxu0 %v797
        %v868 = vpop.f32.mrb[0].mxu0
        %v869 = vadd.f32 0.0, %v868
        %v870 = vpop.f32.mrb[0].mxu0
        %871 = vmatprep.mubr.f32.mxu0 0.0
        %872 = vmatmul.mubr.f32.gmra.mrb[0].mxu0 %v800
        %v873 = vpop.f32.mrb[0].mxu0
        %v874 = vadd.f32 0.0, %v873
        %v875 = vpop.f32.mrb[0].mxu0
        %876 = vdwg.mxu0
        %v877 = vadd.f32 %v782, %v869
        %v878 = vadd.f32 %v787, %v874
        %v879 = vld [vmem:[%s3] sm:$0xff]
        %v880 = vld [vmem:[%s3 + $0x8] sm:$0xff]
        %882 = vset.pattern.permute.xlu0 0
        %883 = vperm.xlu0 %882, %v879
        %v884 = vpop.permute.xlu0 %883
        %887 = vset.pattern.permute.xlu0 0
        %888 = vperm.xlu0 %887, %v880
        %v889 = vpop.permute.xlu0 %888
        %v891 = vadd.f32 %v877, %v884
        %v892 = vadd.f32 %v878, %v889
        %v893 = vld [vmem:[%s4] sm:$0xff]
        %v894 = vld [vmem:[%s4 + $0x8] sm:$0xff]
        %v895 = vld [vmem:[%s5] sm:$0xff]
        %v896 = vld [vmem:[%s5 + $0x8] sm:$0xff]
        %v897 = vlaneseq
        %v898 = vand.u32 %v897, 127
        %v899 = vlaneseq
        %v900 = vshrl.u32 %v899, 7
        %v901 = vmul.u32 %v900, 2
        %vm902 = vcmp.ge.s32.totalorder %v898, %v901
        %v903 = vadd.s32 %v900, 1
        %v904 = vmul.u32 %v903, 2
        %vm905 = vcmp.lt.s32.totalorder %v898, %v904
        %vm906 = vmand %vm902, %vm905
        %v907 = vsel %vm906, 1, 0
        %v908 = vcvt.s32.f32 %v907
        %v909 = vadd.s32 %v900, 8
        %v910 = vmul.u32 %v898, 2
        %vm911 = vcmp.ge.s32.totalorder %v900, %v910
        %vm912 = vcmp.ge.s32.totalorder %v909, %v910
        %v913 = vadd.s32 %v898, 1
        %v914 = vmul.u32 %v913, 2
        %vm915 = vcmp.lt.s32.totalorder %v900, %v914
        %vm916 = vcmp.lt.s32.totalorder %v909, %v914
        %vm917 = vmand %vm911, %vm915
        %vm918 = vmand %vm912, %vm916
        %v919 = vsel %vm917, 1, 0
        %v920 = vsel %vm918, 1, 0
        %v921 = vcvt.s32.f32 %v919
        %v922 = vcvt.s32.f32 %v920
        %vm923 = vcmask 130048
        %v924 = vsel %vm923, %v891, 0.0
        %925 = vadd.xlane.f32.xlu0 %v924
        %v926 = vpop.xlane.xlu0 %925
        %v927 = vsel %vm923, %v892, 0.0
        %928 = vadd.xlane.f32.xlu0 %v927
        %v929 = vpop.xlane.xlu0 %928
        %v930 = vmul.f32 %v891, %v891
        %v931 = vmul.f32 %v892, %v892
        %v932 = vsel %vm923, %v930, 0.0
        %933 = vadd.xlane.f32.xlu0 %v932
        %v934 = vpop.xlane.xlu0 %933
        %v935 = vsel %vm923, %v931, 0.0
        %936 = vadd.xlane.f32.xlu0 %v935
        %v937 = vpop.xlane.xlu0 %936
        %v939 = vsel %vm923, %v908, 0
        %941 = vmatprep.subr.mxu0 0.0
        %942 = vmatpush1.msra.mxu0 %v926
        %943 = vmatprep.subr.mxu0 0.0
        %944 = vmatpush1.msra.mxu0 %v929
        %945 = vmatprep.subr.mxu0 0.0
        %946 = vmatpush1.msra.mxu0 0.0
        %947 = vmatprep.subr.mxu0 0.0
        %948 = vmatpush1.msra.mxu0 0.0
        %949 = vmatprep.subr.mxu0 0.0
        %950 = vmatpush1.msra.mxu0 0.0
        %951 = vmatprep.subr.mxu0 0.0
        %952 = vmatpush1.msra.mxu0 0.0
        %953 = vmatprep.subr.mxu0 0.0
        %954 = vmatpush1.msra.mxu0 0.0
        %955 = vmatprep.subr.mxu0 0.0
        %956 = vmatpush1.msra.mxu0 0.0
        %957 = vmatprep.subr.mxu0 0.0
        %958 = vmatpush1.msra.mxu0 0.0
        %959 = vmatprep.subr.mxu0 0.0
        %960 = vmatpush1.msra.mxu0 0.0
        %961 = vmatprep.subr.mxu0 0.0
        %962 = vmatpush1.msra.mxu0 0.0
        %963 = vmatprep.subr.mxu0 0.0
        %964 = vmatpush1.msra.mxu0 0.0
        %965 = vmatprep.subr.mxu0 0.0
        %966 = vmatpush1.msra.mxu0 0.0
        %967 = vmatprep.subr.mxu0 0.0
        %968 = vmatpush1.msra.mxu0 0.0
        %969 = vmatprep.subr.mxu0 0.0
        %970 = vmatpush1.msra.mxu0 0.0
        %971 = vmatprep.subr.mxu0 0.0
        %972 = vmatpush1.msra.mxu0 0.0
        %973 = vmatprep.subr.mxu0 0.0
        %974 = vmatpush1.msra.mxu0 0.0
        %975 = vmatprep.subr.mxu0 0.0
        %976 = vmatpush1.msra.mxu0 0.0
        %977 = vmatprep.subr.mxu0 0.0
        %978 = vmatpush1.msra.mxu0 0.0
        %979 = vmatprep.subr.mxu0 0.0
        %980 = vmatpush1.msra.mxu0 0.0
        %981 = vmatprep.subr.mxu0 0.0
        %982 = vmatpush1.msra.mxu0 0.0
        %983 = vmatprep.subr.mxu0 0.0
        %984 = vmatpush1.msra.mxu0 0.0
        %985 = vmatprep.subr.mxu0 0.0
        %986 = vmatpush1.msra.mxu0 0.0
        %987 = vmatprep.subr.mxu0 0.0
        %988 = vmatpush1.msra.mxu0 0.0
        %989 = vmatprep.subr.mxu0 0.0
        %990 = vmatpush1.msra.mxu0 0.0
        %991 = vmatprep.subr.mxu0 0.0
        %992 = vmatpush1.msra.mxu0 0.0
        %993 = vmatprep.subr.mxu0 0.0
        %994 = vmatpush1.msra.mxu0 0.0
        %995 = vmatprep.subr.mxu0 0.0
        %996 = vmatpush1.msra.mxu0 0.0
        %997 = vmatprep.subr.mxu0 0.0
        %998 = vmatpush1.msra.mxu0 0.0
        %999 = vmatprep.subr.mxu0 0.0
        %1000 = vmatpush1.msra.mxu0 0.0
        %1001 = vmatprep.subr.mxu0 0.0
        %1002 = vmatpush1.msra.mxu0 0.0
        %1003 = vmatprep.subr.mxu0 0.0
        %1004 = vmatpush1.msra.mxu0 0.0
        %1005 = vmatprep.mubr.f32.mxu0 0.0
        %1006 = vmatmul.mubr.f32.gmra.mrb[0].mxu0 %v939
        %v1007 = vpop.f32.mrb[0].mxu0
        %v1008 = vadd.f32 0.0, %v1007
        %v1009 = vpop.f32.mrb[0].mxu0
        %1010 = vdwg.mxu0
        %v1011 = vrcp.pop 32.0
        %v1012 = vmul.f32 %v1008, %v1011
        %1013 = vmatprep.subr.mxu0 0.0
        %1014 = vmatpush1.msra.mxu0 %v934
        %1015 = vmatprep.subr.mxu0 0.0
        %1016 = vmatpush1.msra.mxu0 %v937
        %1017 = vmatprep.subr.mxu0 0.0
        %1018 = vmatpush1.msra.mxu0 0.0
        %1019 = vmatprep.subr.mxu0 0.0
        %1020 = vmatpush1.msra.mxu0 0.0
        %1021 = vmatprep.subr.mxu0 0.0
        %1022 = vmatpush1.msra.mxu0 0.0
        %1023 = vmatprep.subr.mxu0 0.0
        %1024 = vmatpush1.msra.mxu0 0.0
        %1025 = vmatprep.subr.mxu0 0.0
        %1026 = vmatpush1.msra.mxu0 0.0
        %1027 = vmatprep.subr.mxu0 0.0
        %1028 = vmatpush1.msra.mxu0 0.0
        %1029 = vmatprep.subr.mxu0 0.0
        %1030 = vmatpush1.msra.mxu0 0.0
        %1031 = vmatprep.subr.mxu0 0.0
        %1032 = vmatpush1.msra.mxu0 0.0
        %1033 = vmatprep.subr.mxu0 0.0
        %1034 = vmatpush1.msra.mxu0 0.0
        %1035 = vmatprep.subr.mxu0 0.0
        %1036 = vmatpush1.msra.mxu0 0.0
        %1037 = vmatprep.subr.mxu0 0.0
        %1038 = vmatpush1.msra.mxu0 0.0
        %1039 = vmatprep.subr.mxu0 0.0
        %1040 = vmatpush1.msra.mxu0 0.0
        %1041 = vmatprep.subr.mxu0 0.0
        %1042 = vmatpush1.msra.mxu0 0.0
        %1043 = vmatprep.subr.mxu0 0.0
        %1044 = vmatpush1.msra.mxu0 0.0
        %1045 = vmatprep.subr.mxu0 0.0
        %1046 = vmatpush1.msra.mxu0 0.0
        %1047 = vmatprep.subr.mxu0 0.0
        %1048 = vmatpush1.msra.mxu0 0.0
        %1049 = vmatprep.subr.mxu0 0.0
        %1050 = vmatpush1.msra.mxu0 0.0
        %1051 = vmatprep.subr.mxu0 0.0
        %1052 = vmatpush1.msra.mxu0 0.0
        %1053 = vmatprep.subr.mxu0 0.0
        %1054 = vmatpush1.msra.mxu0 0.0
        %1055 = vmatprep.subr.mxu0 0.0
        %1056 = vmatpush1.msra.mxu0 0.0
        %1057 = vmatprep.subr.mxu0 0.0
        %1058 = vmatpush1.msra.mxu0 0.0
        %1059 = vmatprep.subr.mxu0 0.0
        %1060 = vmatpush1.msra.mxu0 0.0
        %1061 = vmatprep.subr.mxu0 0.0
        %1062 = vmatpush1.msra.mxu0 0.0
        %1063 = vmatprep.subr.mxu0 0.0
        %1064 = vmatpush1.msra.mxu0 0.0
        %1065 = vmatprep.subr.mxu0 0.0
        %1066 = vmatpush1.msra.mxu0 0.0
        %1067 = vmatprep.subr.mxu0 0.0
        %1068 = vmatpush1.msra.mxu0 0.0
        %1069 = vmatprep.subr.mxu0 0.0
        %1070 = vmatpush1.msra.mxu0 0.0
        %1071 = vmatprep.subr.mxu0 0.0
        %1072 = vmatpush1.msra.mxu0 0.0
        %1073 = vmatprep.subr.mxu0 0.0
        %1074 = vmatpush1.msra.mxu0 0.0
        %1075 = vmatprep.subr.mxu0 0.0
        %1076 = vmatpush1.msra.mxu0 0.0
        %1077 = vmatprep.mubr.f32.mxu0 0.0
        %1078 = vmatmul.mubr.f32.gmra.mrb[0].mxu0 %v939
        %v1079 = vpop.f32.mrb[0].mxu0
        %v1080 = vadd.f32 0.0, %v1079
        %v1081 = vpop.f32.mrb[0].mxu0
        %1082 = vdwg.mxu0
        %v1083 = vmul.f32 %v1080, %v1011
        %v1084 = vmul.f32 %v1012, %v1012
        %v1085 = vsub.f32 %v1083, %v1084
        %v1087 = vsel %vm627, %v921, 0
        %v1090 = vsel %vm627, %v922, 0
        %1092 = vmatprep.subr.mxu0 0.0
        %1093 = vmatpush1.msra.mxu0 %v1012
        %1094 = vmatprep.subr.mxu0 0.0
        %1095 = vmatpush1.msra.mxu0 0.0
        %1096 = vmatprep.subr.mxu0 0.0
        %1097 = vmatpush1.msra.mxu0 0.0
        %1098 = vmatprep.subr.mxu0 0.0
        %1099 = vmatpush1.msra.mxu0 0.0
        %1100 = vmatprep.subr.mxu0 0.0
        %1101 = vmatpush1.msra.mxu0 0.0
        %1102 = vmatprep.subr.mxu0 0.0
        %1103 = vmatpush1.msra.mxu0 0.0
        %1104 = vmatprep.subr.mxu0 0.0
        %1105 = vmatpush1.msra.mxu0 0.0
        %1106 = vmatprep.subr.mxu0 0.0
        %1107 = vmatpush1.msra.mxu0 0.0
        %1108 = vmatprep.subr.mxu0 0.0
        %1109 = vmatpush1.msra.mxu0 0.0
        %1110 = vmatprep.subr.mxu0 0.0
        %1111 = vmatpush1.msra.mxu0 0.0
        %1112 = vmatprep.subr.mxu0 0.0
        %1113 = vmatpush1.msra.mxu0 0.0
        %1114 = vmatprep.subr.mxu0 0.0
        %1115 = vmatpush1.msra.mxu0 0.0
        %1116 = vmatprep.subr.mxu0 0.0
        %1117 = vmatpush1.msra.mxu0 0.0
        %1118 = vmatprep.subr.mxu0 0.0
        %1119 = vmatpush1.msra.mxu0 0.0
        %1120 = vmatprep.subr.mxu0 0.0
        %1121 = vmatpush1.msra.mxu0 0.0
        %1122 = vmatprep.subr.mxu0 0.0
        %1123 = vmatpush1.msra.mxu0 0.0
        %1124 = vmatprep.subr.mxu0 0.0
        %1125 = vmatpush1.msra.mxu0 0.0
        %1126 = vmatprep.subr.mxu0 0.0
        %1127 = vmatpush1.msra.mxu0 0.0
        %1128 = vmatprep.subr.mxu0 0.0
        %1129 = vmatpush1.msra.mxu0 0.0
        %1130 = vmatprep.subr.mxu0 0.0
        %1131 = vmatpush1.msra.mxu0 0.0
        %1132 = vmatprep.subr.mxu0 0.0
        %1133 = vmatpush1.msra.mxu0 0.0
        %1134 = vmatprep.subr.mxu0 0.0
        %1135 = vmatpush1.msra.mxu0 0.0
        %1136 = vmatprep.subr.mxu0 0.0
        %1137 = vmatpush1.msra.mxu0 0.0
        %1138 = vmatprep.subr.mxu0 0.0
        %1139 = vmatpush1.msra.mxu0 0.0
        %1140 = vmatprep.subr.mxu0 0.0
        %1141 = vmatpush1.msra.mxu0 0.0
        %1142 = vmatprep.subr.mxu0 0.0
        %1143 = vmatpush1.msra.mxu0 0.0
        %1144 = vmatprep.subr.mxu0 0.0
        %1145 = vmatpush1.msra.mxu0 0.0
        %1146 = vmatprep.subr.mxu0 0.0
        %1147 = vmatpush1.msra.mxu0 0.0
        %1148 = vmatprep.subr.mxu0 0.0
        %1149 = vmatpush1.msra.mxu0 0.0
        %1150 = vmatprep.subr.mxu0 0.0
        %1151 = vmatpush1.msra.mxu0 0.0
        %1152 = vmatprep.subr.mxu0 0.0
        %1153 = vmatpush1.msra.mxu0 0.0
        %1154 = vmatprep.subr.mxu0 0.0
        %1155 = vmatpush1.msra.mxu0 0.0
        %1156 = vmatprep.mubr.f32.mxu0 0.0
        %1157 = vmatmul.mubr.f32.gmra.mrb[0].mxu0 %v1087
        %v1158 = vpop.f32.mrb[0].mxu0
        %v1159 = vadd.f32 0.0, %v1158
        %v1160 = vpop.f32.mrb[0].mxu0
        %1161 = vmatprep.mubr.f32.mxu0 0.0
        %1162 = vmatmul.mubr.f32.gmra.mrb[0].mxu0 %v1090
        %v1163 = vpop.f32.mrb[0].mxu0
        %v1164 = vadd.f32 0.0, %v1163
        %v1165 = vpop.f32.mrb[0].mxu0
        %1166 = vdwg.mxu0
        %1168 = vset.pattern.permute.xlu0 0
        %1169 = vperm.xlu0 %1168, %v1159
        %v1170 = vpop.permute.xlu0 %1169
        %1173 = vset.pattern.permute.xlu0 0
        %1174 = vperm.xlu0 %1173, %v1164
        %v1175 = vpop.permute.xlu0 %1174
        %v1177 = vsub.f32 %v891, %v1170
        %v1178 = vsub.f32 %v892, %v1175
        %1179 = vmatprep.subr.mxu0 0.0
        %1180 = vmatpush1.msra.mxu0 %v1085
        %1181 = vmatprep.subr.mxu0 0.0
        %1182 = vmatpush1.msra.mxu0 0.0
        %1183 = vmatprep.subr.mxu0 0.0
        %1184 = vmatpush1.msra.mxu0 0.0
        %1185 = vmatprep.subr.mxu0 0.0
        %1186 = vmatpush1.msra.mxu0 0.0
        %1187 = vmatprep.subr.mxu0 0.0
        %1188 = vmatpush1.msra.mxu0 0.0
        %1189 = vmatprep.subr.mxu0 0.0
        %1190 = vmatpush1.msra.mxu0 0.0
        %1191 = vmatprep.subr.mxu0 0.0
        %1192 = vmatpush1.msra.mxu0 0.0
        %1193 = vmatprep.subr.mxu0 0.0
        %1194 = vmatpush1.msra.mxu0 0.0
        %1195 = vmatprep.subr.mxu0 0.0
        %1196 = vmatpush1.msra.mxu0 0.0
        %1197 = vmatprep.subr.mxu0 0.0
        %1198 = vmatpush1.msra.mxu0 0.0
        %1199 = vmatprep.subr.mxu0 0.0
        %1200 = vmatpush1.msra.mxu0 0.0
        %1201 = vmatprep.subr.mxu0 0.0
        %1202 = vmatpush1.msra.mxu0 0.0
        %1203 = vmatprep.subr.mxu0 0.0
        %1204 = vmatpush1.msra.mxu0 0.0
        %1205 = vmatprep.subr.mxu0 0.0
        %1206 = vmatpush1.msra.mxu0 0.0
        %1207 = vmatprep.subr.mxu0 0.0
        %1208 = vmatpush1.msra.mxu0 0.0
        %1209 = vmatprep.subr.mxu0 0.0
        %1210 = vmatpush1.msra.mxu0 0.0
        %1211 = vmatprep.subr.mxu0 0.0
        %1212 = vmatpush1.msra.mxu0 0.0
        %1213 = vmatprep.subr.mxu0 0.0
        %1214 = vmatpush1.msra.mxu0 0.0
        %1215 = vmatprep.subr.mxu0 0.0
        %1216 = vmatpush1.msra.mxu0 0.0
        %1217 = vmatprep.subr.mxu0 0.0
        %1218 = vmatpush1.msra.mxu0 0.0
        %1219 = vmatprep.subr.mxu0 0.0
        %1220 = vmatpush1.msra.mxu0 0.0
        %1221 = vmatprep.subr.mxu0 0.0
        %1222 = vmatpush1.msra.mxu0 0.0
        %1223 = vmatprep.subr.mxu0 0.0
        %1224 = vmatpush1.msra.mxu0 0.0
        %1225 = vmatprep.subr.mxu0 0.0
        %1226 = vmatpush1.msra.mxu0 0.0
        %1227 = vmatprep.subr.mxu0 0.0
        %1228 = vmatpush1.msra.mxu0 0.0
        %1229 = vmatprep.subr.mxu0 0.0
        %1230 = vmatpush1.msra.mxu0 0.0
        %1231 = vmatprep.subr.mxu0 0.0
        %1232 = vmatpush1.msra.mxu0 0.0
        %1233 = vmatprep.subr.mxu0 0.0
        %1234 = vmatpush1.msra.mxu0 0.0
        %1235 = vmatprep.subr.mxu0 0.0
        %1236 = vmatpush1.msra.mxu0 0.0
        %1237 = vmatprep.subr.mxu0 0.0
        %1238 = vmatpush1.msra.mxu0 0.0
        %1239 = vmatprep.subr.mxu0 0.0
        %1240 = vmatpush1.msra.mxu0 0.0
        %1241 = vmatprep.subr.mxu0 0.0
        %1242 = vmatpush1.msra.mxu0 0.0
        %1243 = vmatprep.mubr.f32.mxu0 0.0
        %1244 = vmatmul.mubr.f32.gmra.mrb[0].mxu0 %v1087
        %v1245 = vpop.f32.mrb[0].mxu0
        %v1246 = vadd.f32 1e-05, %v1245
        %v1247 = vpop.f32.mrb[0].mxu0
        %1248 = vmatprep.mubr.f32.mxu0 0.0
        %1249 = vmatmul.mubr.f32.gmra.mrb[0].mxu0 %v1090
        %v1250 = vpop.f32.mrb[0].mxu0
        %v1251 = vadd.f32 1e-05, %v1250
        %v1252 = vpop.f32.mrb[0].mxu0
        %1253 = vdwg.mxu0
        %v1254 = vrsqrt.pop %v1246
        %v1255 = vrsqrt.pop %v1251
        %1257 = vset.pattern.permute.xlu0 0
        %1258 = vperm.xlu0 %1257, %v1254
        %v1259 = vpop.permute.xlu0 %1258
        %1262 = vset.pattern.permute.xlu0 0
        %1263 = vperm.xlu0 %1262, %v1255
        %v1264 = vpop.permute.xlu0 %1263
        %v1266 = vmul.f32 %v1177, %v1259
        %v1267 = vmul.f32 %v1178, %v1264
        %1269 = vset.pattern.permute.xlu0 0
        %1270 = vperm.xlu0 %1269, %v893
        %v1271 = vpop.permute.xlu0 %1270
        %1274 = vset.pattern.permute.xlu0 0
        %1275 = vperm.xlu0 %1274, %v894
        %v1276 = vpop.permute.xlu0 %1275
        %v1278 = vmul.f32 %v1266, %v1271
        %v1279 = vmul.f32 %v1267, %v1276
        %1281 = vset.pattern.permute.xlu0 0
        %1282 = vperm.xlu0 %1281, %v895
        %v1283 = vpop.permute.xlu0 %1282
        %1286 = vset.pattern.permute.xlu0 0
        %1287 = vperm.xlu0 %1286, %v896
        %v1288 = vpop.permute.xlu0 %1287
        %v1290 = vadd.f32 %v1278, %v1283
        %v1291 = vadd.f32 %v1279, %v1288
        %v1292 = vmax.f32 %v1290, 0.0
        %v1293 = vmax.f32 %v1291, 0.0
        %v1294 = vand.u32 2147483647, %v1290
        %v1295 = vand.u32 2147483647, %v1291
        %v1296 = vsub.f32 0.0, %v1294
        %v1297 = vsub.f32 0.0, %v1295
        %v1298 = vmul.f32 %v1296, 1.442695
        %v1299 = vpow.pop %v1298
        %v1300 = vmul.f32 %v1297, 1.442695
        %v1301 = vpow.pop %v1300
        %v1302 = vadd.f32 %v1299, 1.0
        %v1303 = vadd.f32 %v1301, 1.0
        %v1304 = vlog2.pop %v1302
        %v1305 = vmul.f32 %v1304, 0.6931472
        %v1306 = vlog2.pop %v1303
        %v1307 = vmul.f32 %v1306, 0.6931472
        %v1308 = vadd.f32 %v1292, %v1305
        %v1309 = vadd.f32 %v1293, %v1307
        %v1310 = vtanh.pop %v1308
        %v1311 = vtanh.pop %v1309
        %v1312 = vmul.f32 %v1290, %v1310
        %v1313 = vmul.f32 %v1291, %v1311
        %1315 = vset.pattern.permute.xlu0 0
        %1316 = vperm.xlu0 %1315, %v599
        %v1317 = vpop.permute.xlu0 %1316
        %1320 = vset.pattern.permute.xlu0 0
        %1321 = vperm.xlu0 %1320, %v604
        %v1322 = vpop.permute.xlu0 %1321
        %v1324 = vmul.f32 %v1317, %v1312
        %v1325 = vmul.f32 %v1322, %v1313
        %1327 = vset.pattern.permute.xlu0 0
        %1328 = vperm.xlu0 %1327, %v609
        %v1329 = vpop.permute.xlu0 %1328
        %1332 = vset.pattern.permute.xlu0 0
        %1333 = vperm.xlu0 %1332, %v614
        %v1334 = vpop.permute.xlu0 %1333
        %v1336 = vadd.f32 %v1324, %v1329
        %v1337 = vadd.f32 %v1325, %v1334
        %vm1338 = vcmask 146432
        %1339 = vst.msk [vmem:[#allocation2] sm:$0xff] %vm1338, 0.0
        %1340 = vst.msk [vmem:[#allocation2 + $0x8] sm:$0xff] %vm1338, 0.0
        %1343 = vrot.lane.b32.xlu0 %v1336, 1
        %v1344 = vpop.permute.xlu0 %1343
        %1345 = vrot.lane.b32.xlu0 %v1337, 1
        %v1346 = vpop.permute.xlu0 %1345
        %vm1349 = vcmask 138248
        %1350 = vst.msk [vmem:[#allocation2] sm:$0xff] %vm1349, %v1344
        %1351 = vst.msk [vmem:[#allocation2 + $0x8] sm:$0xff] %vm1349, %v1346
        %v1352 = vld [vmem:[%s6] sm:$0xff]
        %v1353 = vld [vmem:[%s6 + $0x8] sm:$0xff]
        %v1354 = vld [vmem:[#allocation2] sm:$0xff]
        %v1355 = vld [vmem:[#allocation2 + $0x8] sm:$0xff]
        %s1356 = scalar_lea.vmem %s6, 16
        %v1357 = vld [vmem:[%s1356] sm:$0xff]
        %v1358 = vld [vmem:[%s1356 + $0x8] sm:$0xff]
        %1361 = vrot.lane.b32.xlu0 %v1354, 127
        %v1362 = vpop.permute.xlu0 %1361
        %1363 = vrot.lane.b32.xlu0 %v1355, 127
        %v1364 = vpop.permute.xlu0 %1363
        %v1368 = vsel %vm923, %v1357, 0
        %v1371 = vsel %vm923, %v1358, 0
        %1373 = vmatprep.subr.mxu0 0.0
        %1374 = vmatpush1.msra.mxu0 %v1362
        %1375 = vmatprep.subr.mxu0 0.0
        %1376 = vmatpush1.msra.mxu0 %v1364
        %1377 = vmatprep.subr.mxu0 0.0
        %1378 = vmatpush1.msra.mxu0 0.0
        %1379 = vmatprep.subr.mxu0 0.0
        %1380 = vmatpush1.msra.mxu0 0.0
        %1381 = vmatprep.subr.mxu0 0.0
        %1382 = vmatpush1.msra.mxu0 0.0
        %1383 = vmatprep.subr.mxu0 0.0
        %1384 = vmatpush1.msra.mxu0 0.0
        %1385 = vmatprep.subr.mxu0 0.0
        %1386 = vmatpush1.msra.mxu0 0.0
        %1387 = vmatprep.subr.mxu0 0.0
        %1388 = vmatpush1.msra.mxu0 0.0
        %1389 = vmatprep.subr.mxu0 0.0
        %1390 = vmatpush1.msra.mxu0 0.0
        %1391 = vmatprep.subr.mxu0 0.0
        %1392 = vmatpush1.msra.mxu0 0.0
        %1393 = vmatprep.subr.mxu0 0.0
        %1394 = vmatpush1.msra.mxu0 0.0
        %1395 = vmatprep.subr.mxu0 0.0
        %1396 = vmatpush1.msra.mxu0 0.0
        %1397 = vmatprep.subr.mxu0 0.0
        %1398 = vmatpush1.msra.mxu0 0.0
        %1399 = vmatprep.subr.mxu0 0.0
        %1400 = vmatpush1.msra.mxu0 0.0
        %1401 = vmatprep.subr.mxu0 0.0
        %1402 = vmatpush1.msra.mxu0 0.0
        %1403 = vmatprep.subr.mxu0 0.0
        %1404 = vmatpush1.msra.mxu0 0.0
        %1405 = vmatprep.subr.mxu0 0.0
        %1406 = vmatpush1.msra.mxu0 0.0
        %1407 = vmatprep.subr.mxu0 0.0
        %1408 = vmatpush1.msra.mxu0 0.0
        %1409 = vmatprep.subr.mxu0 0.0
        %1410 = vmatpush1.msra.mxu0 0.0
        %1411 = vmatprep.subr.mxu0 0.0
        %1412 = vmatpush1.msra.mxu0 0.0
        %1413 = vmatprep.subr.mxu0 0.0
        %1414 = vmatpush1.msra.mxu0 0.0
        %1415 = vmatprep.subr.mxu0 0.0
        %1416 = vmatpush1.msra.mxu0 0.0
        %1417 = vmatprep.subr.mxu0 0.0
        %1418 = vmatpush1.msra.mxu0 0.0
        %1419 = vmatprep.subr.mxu0 0.0
        %1420 = vmatpush1.msra.mxu0 0.0
        %1421 = vmatprep.subr.mxu0 0.0
        %1422 = vmatpush1.msra.mxu0 0.0
        %1423 = vmatprep.subr.mxu0 0.0
        %1424 = vmatpush1.msra.mxu0 0.0
        %1425 = vmatprep.subr.mxu0 0.0
        %1426 = vmatpush1.msra.mxu0 0.0
        %1427 = vmatprep.subr.mxu0 0.0
        %1428 = vmatpush1.msra.mxu0 0.0
        %1429 = vmatprep.subr.mxu0 0.0
        %1430 = vmatpush1.msra.mxu0 0.0
        %1431 = vmatprep.subr.mxu0 0.0
        %1432 = vmatpush1.msra.mxu0 0.0
        %1433 = vmatprep.subr.mxu0 0.0
        %1434 = vmatpush1.msra.mxu0 0.0
        %1435 = vmatprep.subr.mxu0 0.0
        %1436 = vmatpush1.msra.mxu0 0.0
        %1437 = vmatprep.mubr.f32.mxu0 0.0
        %1438 = vmatmul.mubr.f32.gmra.mrb[0].mxu0 %v1368
        %v1439 = vpop.f32.mrb[0].mxu0
        %v1440 = vadd.f32 0.0, %v1439
        %v1441 = vpop.f32.mrb[0].mxu0
        %1442 = vmatprep.mubr.f32.mxu0 0.0
        %1443 = vmatmul.mubr.f32.gmra.mrb[0].mxu0 %v1371
        %v1444 = vpop.f32.mrb[0].mxu0
        %v1445 = vadd.f32 0.0, %v1444
        %v1446 = vpop.f32.mrb[0].mxu0
        %1447 = vdwg.mxu0
        %v1449 = vsel %vm923, %v1352, 0
        %v1452 = vsel %vm923, %v1353, 0
        %1454 = vmatprep.subr.mxu0 0.0
        %1455 = vmatpush1.msra.mxu0 %v1354
        %1456 = vmatprep.subr.mxu0 0.0
        %1457 = vmatpush1.msra.mxu0 %v1355
        %1458 = vmatprep.subr.mxu0 0.0
        %1459 = vmatpush1.msra.mxu0 0.0
        %1460 = vmatprep.subr.mxu0 0.0
        %1461 = vmatpush1.msra.mxu0 0.0
        %1462 = vmatprep.subr.mxu0 0.0
        %1463 = vmatpush1.msra.mxu0 0.0
        %1464 = vmatprep.subr.mxu0 0.0
        %1465 = vmatpush1.msra.mxu0 0.0
        %1466 = vmatprep.subr.mxu0 0.0
        %1467 = vmatpush1.msra.mxu0 0.0
        %1468 = vmatprep.subr.mxu0 0.0
        %1469 = vmatpush1.msra.mxu0 0.0
        %1470 = vmatprep.subr.mxu0 0.0
        %1471 = vmatpush1.msra.mxu0 0.0
        %1472 = vmatprep.subr.mxu0 0.0
        %1473 = vmatpush1.msra.mxu0 0.0
        %1474 = vmatprep.subr.mxu0 0.0
        %1475 = vmatpush1.msra.mxu0 0.0
        %1476 = vmatprep.subr.mxu0 0.0
        %1477 = vmatpush1.msra.mxu0 0.0
        %1478 = vmatprep.subr.mxu0 0.0
        %1479 = vmatpush1.msra.mxu0 0.0
        %1480 = vmatprep.subr.mxu0 0.0
        %1481 = vmatpush1.msra.mxu0 0.0
        %1482 = vmatprep.subr.mxu0 0.0
        %1483 = vmatpush1.msra.mxu0 0.0
        %1484 = vmatprep.subr.mxu0 0.0
        %1485 = vmatpush1.msra.mxu0 0.0
        %1486 = vmatprep.subr.mxu0 0.0
        %1487 = vmatpush1.msra.mxu0 0.0
        %1488 = vmatprep.subr.mxu0 0.0
        %1489 = vmatpush1.msra.mxu0 0.0
        %1490 = vmatprep.subr.mxu0 0.0
        %1491 = vmatpush1.msra.mxu0 0.0
        %1492 = vmatprep.subr.mxu0 0.0
        %1493 = vmatpush1.msra.mxu0 0.0
        %1494 = vmatprep.subr.mxu0 0.0
        %1495 = vmatpush1.msra.mxu0 0.0
        %1496 = vmatprep.subr.mxu0 0.0
        %1497 = vmatpush1.msra.mxu0 0.0
        %1498 = vmatprep.subr.mxu0 0.0
        %1499 = vmatpush1.msra.mxu0 0.0
        %1500 = vmatprep.subr.mxu0 0.0
        %1501 = vmatpush1.msra.mxu0 0.0
        %1502 = vmatprep.subr.mxu0 0.0
        %1503 = vmatpush1.msra.mxu0 0.0
        %1504 = vmatprep.subr.mxu0 0.0
        %1505 = vmatpush1.msra.mxu0 0.0
        %1506 = vmatprep.subr.mxu0 0.0
        %1507 = vmatpush1.msra.mxu0 0.0
        %1508 = vmatprep.subr.mxu0 0.0
        %1509 = vmatpush1.msra.mxu0 0.0
        %1510 = vmatprep.subr.mxu0 0.0
        %1511 = vmatpush1.msra.mxu0 0.0
        %1512 = vmatprep.subr.mxu0 0.0
        %1513 = vmatpush1.msra.mxu0 0.0
        %1514 = vmatprep.subr.mxu0 0.0
        %1515 = vmatpush1.msra.mxu0 0.0
        %1516 = vmatprep.subr.mxu0 0.0
        %1517 = vmatpush1.msra.mxu0 0.0
        %1518 = vmatprep.mubr.f32.mxu0 0.0
        %1519 = vmatmul.mubr.f32.gmra.mrb[0].mxu0 %v1449
        %v1520 = vpop.f32.mrb[0].mxu0
        %v1521 = vadd.f32 %v1440, %v1520
        %v1522 = vpop.f32.mrb[0].mxu0
        %1523 = vmatprep.mubr.f32.mxu0 0.0
        %1524 = vmatmul.mubr.f32.gmra.mrb[0].mxu0 %v1452
        %v1525 = vpop.f32.mrb[0].mxu0
        %v1526 = vadd.f32 %v1445, %v1525
        %v1527 = vpop.f32.mrb[0].mxu0
        %1528 = vdwg.mxu0
        %s1529 = scalar_lea.vmem %s6, 32
        %v1530 = vld [vmem:[%s1529] sm:$0xff]
        %v1531 = vld [vmem:[%s1529 + $0x8] sm:$0xff]
        %1532 = vrot.lane.b32.xlu0 %v1354, 126
        %v1533 = vpop.permute.xlu0 %1532
        %1534 = vrot.lane.b32.xlu0 %v1355, 126
        %v1535 = vpop.permute.xlu0 %1534
        %v1539 = vsel %vm923, %v1530, 0
        %v1542 = vsel %vm923, %v1531, 0
        %1544 = vmatprep.subr.mxu0 0.0
        %1545 = vmatpush1.msra.mxu0 %v1533
        %1546 = vmatprep.subr.mxu0 0.0
        %1547 = vmatpush1.msra.mxu0 %v1535
        %1548 = vmatprep.subr.mxu0 0.0
        %1549 = vmatpush1.msra.mxu0 0.0
        %1550 = vmatprep.subr.mxu0 0.0
        %1551 = vmatpush1.msra.mxu0 0.0
        %1552 = vmatprep.subr.mxu0 0.0
        %1553 = vmatpush1.msra.mxu0 0.0
        %1554 = vmatprep.subr.mxu0 0.0
        %1555 = vmatpush1.msra.mxu0 0.0
        %1556 = vmatprep.subr.mxu0 0.0
        %1557 = vmatpush1.msra.mxu0 0.0
        %1558 = vmatprep.subr.mxu0 0.0
        %1559 = vmatpush1.msra.mxu0 0.0
        %1560 = vmatprep.subr.mxu0 0.0
        %1561 = vmatpush1.msra.mxu0 0.0
        %1562 = vmatprep.subr.mxu0 0.0
        %1563 = vmatpush1.msra.mxu0 0.0
        %1564 = vmatprep.subr.mxu0 0.0
        %1565 = vmatpush1.msra.mxu0 0.0
        %1566 = vmatprep.subr.mxu0 0.0
        %1567 = vmatpush1.msra.mxu0 0.0
        %1568 = vmatprep.subr.mxu0 0.0
        %1569 = vmatpush1.msra.mxu0 0.0
        %1570 = vmatprep.subr.mxu0 0.0
        %1571 = vmatpush1.msra.mxu0 0.0
        %1572 = vmatprep.subr.mxu0 0.0
        %1573 = vmatpush1.msra.mxu0 0.0
        %1574 = vmatprep.subr.mxu0 0.0
        %1575 = vmatpush1.msra.mxu0 0.0
        %1576 = vmatprep.subr.mxu0 0.0
        %1577 = vmatpush1.msra.mxu0 0.0
        %1578 = vmatprep.subr.mxu0 0.0
        %1579 = vmatpush1.msra.mxu0 0.0
        %1580 = vmatprep.subr.mxu0 0.0
        %1581 = vmatpush1.msra.mxu0 0.0
        %1582 = vmatprep.subr.mxu0 0.0
        %1583 = vmatpush1.msra.mxu0 0.0
        %1584 = vmatprep.subr.mxu0 0.0
        %1585 = vmatpush1.msra.mxu0 0.0
        %1586 = vmatprep.subr.mxu0 0.0
        %1587 = vmatpush1.msra.mxu0 0.0
        %1588 = vmatprep.subr.mxu0 0.0
        %1589 = vmatpush1.msra.mxu0 0.0
        %1590 = vmatprep.subr.mxu0 0.0
        %1591 = vmatpush1.msra.mxu0 0.0
        %1592 = vmatprep.subr.mxu0 0.0
        %1593 = vmatpush1.msra.mxu0 0.0
        %1594 = vmatprep.subr.mxu0 0.0
        %1595 = vmatpush1.msra.mxu0 0.0
        %1596 = vmatprep.subr.mxu0 0.0
        %1597 = vmatpush1.msra.mxu0 0.0
        %1598 = vmatprep.subr.mxu0 0.0
        %1599 = vmatpush1.msra.mxu0 0.0
        %1600 = vmatprep.subr.mxu0 0.0
        %1601 = vmatpush1.msra.mxu0 0.0
        %1602 = vmatprep.subr.mxu0 0.0
        %1603 = vmatpush1.msra.mxu0 0.0
        %1604 = vmatprep.subr.mxu0 0.0
        %1605 = vmatpush1.msra.mxu0 0.0
        %1606 = vmatprep.subr.mxu0 0.0
        %1607 = vmatpush1.msra.mxu0 0.0
        %1608 = vmatprep.mubr.f32.mxu0 0.0
        %1609 = vmatmul.mubr.f32.gmra.mrb[0].mxu0 %v1539
        %v1610 = vpop.f32.mrb[0].mxu0
        %v1611 = vadd.f32 0.0, %v1610
        %v1612 = vpop.f32.mrb[0].mxu0
        %1613 = vmatprep.mubr.f32.mxu0 0.0
        %1614 = vmatmul.mubr.f32.gmra.mrb[0].mxu0 %v1542
        %v1615 = vpop.f32.mrb[0].mxu0
        %v1616 = vadd.f32 0.0, %v1615
        %v1617 = vpop.f32.mrb[0].mxu0
        %1618 = vdwg.mxu0
        %v1619 = vadd.f32 %v1521, %v1611
        %v1620 = vadd.f32 %v1526, %v1616
        %v1621 = vld [vmem:[%s7] sm:$0xff]
        %v1622 = vld [vmem:[%s7 + $0x8] sm:$0xff]
        %1624 = vset.pattern.permute.xlu0 0
        %1625 = vperm.xlu0 %1624, %v1621
        %v1626 = vpop.permute.xlu0 %1625
        %1629 = vset.pattern.permute.xlu0 0
        %1630 = vperm.xlu0 %1629, %v1622
        %v1631 = vpop.permute.xlu0 %1630
        %v1633 = vadd.f32 %v1619, %v1626
        %v1634 = vadd.f32 %v1620, %v1631
        %v1635 = vld [vmem:[%s8] sm:$0xff]
        %v1636 = vld [vmem:[%s8 + $0x8] sm:$0xff]
        %v1637 = vld [vmem:[%s9] sm:$0xff]
        %v1638 = vld [vmem:[%s9 + $0x8] sm:$0xff]
        %v1639 = vsel %vm923, %v1633, 0.0
        %1640 = vadd.xlane.f32.xlu0 %v1639
        %v1641 = vpop.xlane.xlu0 %1640
        %v1642 = vsel %vm923, %v1634, 0.0
        %1643 = vadd.xlane.f32.xlu0 %v1642
        %v1644 = vpop.xlane.xlu0 %1643
        %v1645 = vmul.f32 %v1633, %v1633
        %v1646 = vmul.f32 %v1634, %v1634
        %v1647 = vsel %vm923, %v1645, 0.0
        %1648 = vadd.xlane.f32.xlu0 %v1647
        %v1649 = vpop.xlane.xlu0 %1648
        %v1650 = vsel %vm923, %v1646, 0.0
        %1651 = vadd.xlane.f32.xlu0 %v1650
        %v1652 = vpop.xlane.xlu0 %1651
        %1653 = vmatprep.subr.mxu0 0.0
        %1654 = vmatpush1.msra.mxu0 %v1641
        %1655 = vmatprep.subr.mxu0 0.0
        %1656 = vmatpush1.msra.mxu0 %v1644
        %1657 = vmatprep.subr.mxu0 0.0
        %1658 = vmatpush1.msra.mxu0 0.0
        %1659 = vmatprep.subr.mxu0 0.0
        %1660 = vmatpush1.msra.mxu0 0.0
        %1661 = vmatprep.subr.mxu0 0.0
        %1662 = vmatpush1.msra.mxu0 0.0
        %1663 = vmatprep.subr.mxu0 0.0
        %1664 = vmatpush1.msra.mxu0 0.0
        %1665 = vmatprep.subr.mxu0 0.0
        %1666 = vmatpush1.msra.mxu0 0.0
        %1667 = vmatprep.subr.mxu0 0.0
        %1668 = vmatpush1.msra.mxu0 0.0
        %1669 = vmatprep.subr.mxu0 0.0
        %1670 = vmatpush1.msra.mxu0 0.0
        %1671 = vmatprep.subr.mxu0 0.0
        %1672 = vmatpush1.msra.mxu0 0.0
        %1673 = vmatprep.subr.mxu0 0.0
        %1674 = vmatpush1.msra.mxu0 0.0
        %1675 = vmatprep.subr.mxu0 0.0
        %1676 = vmatpush1.msra.mxu0 0.0
        %1677 = vmatprep.subr.mxu0 0.0
        %1678 = vmatpush1.msra.mxu0 0.0
        %1679 = vmatprep.subr.mxu0 0.0
        %1680 = vmatpush1.msra.mxu0 0.0
        %1681 = vmatprep.subr.mxu0 0.0
        %1682 = vmatpush1.msra.mxu0 0.0
        %1683 = vmatprep.subr.mxu0 0.0
        %1684 = vmatpush1.msra.mxu0 0.0
        %1685 = vmatprep.subr.mxu0 0.0
        %1686 = vmatpush1.msra.mxu0 0.0
        %1687 = vmatprep.subr.mxu0 0.0
        %1688 = vmatpush1.msra.mxu0 0.0
        %1689 = vmatprep.subr.mxu0 0.0
        %1690 = vmatpush1.msra.mxu0 0.0
        %1691 = vmatprep.subr.mxu0 0.0
        %1692 = vmatpush1.msra.mxu0 0.0
        %1693 = vmatprep.subr.mxu0 0.0
        %1694 = vmatpush1.msra.mxu0 0.0
        %1695 = vmatprep.subr.mxu0 0.0
        %1696 = vmatpush1.msra.mxu0 0.0
        %1697 = vmatprep.subr.mxu0 0.0
        %1698 = vmatpush1.msra.mxu0 0.0
        %1699 = vmatprep.subr.mxu0 0.0
        %1700 = vmatpush1.msra.mxu0 0.0
        %1701 = vmatprep.subr.mxu0 0.0
        %1702 = vmatpush1.msra.mxu0 0.0
        %1703 = vmatprep.subr.mxu0 0.0
        %1704 = vmatpush1.msra.mxu0 0.0
        %1705 = vmatprep.subr.mxu0 0.0
        %1706 = vmatpush1.msra.mxu0 0.0
        %1707 = vmatprep.subr.mxu0 0.0
        %1708 = vmatpush1.msra.mxu0 0.0
        %1709 = vmatprep.subr.mxu0 0.0
        %1710 = vmatpush1.msra.mxu0 0.0
        %1711 = vmatprep.subr.mxu0 0.0
        %1712 = vmatpush1.msra.mxu0 0.0
        %1713 = vmatprep.subr.mxu0 0.0
        %1714 = vmatpush1.msra.mxu0 0.0
        %1715 = vmatprep.subr.mxu0 0.0
        %1716 = vmatpush1.msra.mxu0 0.0
        %1717 = vmatprep.mubr.f32.mxu0 0.0
        %1718 = vmatmul.mubr.f32.gmra.mrb[0].mxu0 %v939
        %v1719 = vpop.f32.mrb[0].mxu0
        %v1720 = vadd.f32 0.0, %v1719
        %v1721 = vpop.f32.mrb[0].mxu0
        %1722 = vdwg.mxu0
        %v1723 = vmul.f32 %v1720, %v1011
        %1724 = vmatprep.subr.mxu0 0.0
        %1725 = vmatpush1.msra.mxu0 %v1649
        %1726 = vmatprep.subr.mxu0 0.0
        %1727 = vmatpush1.msra.mxu0 %v1652
        %1728 = vmatprep.subr.mxu0 0.0
        %1729 = vmatpush1.msra.mxu0 0.0
        %1730 = vmatprep.subr.mxu0 0.0
        %1731 = vmatpush1.msra.mxu0 0.0
        %1732 = vmatprep.subr.mxu0 0.0
        %1733 = vmatpush1.msra.mxu0 0.0
        %1734 = vmatprep.subr.mxu0 0.0
        %1735 = vmatpush1.msra.mxu0 0.0
        %1736 = vmatprep.subr.mxu0 0.0
        %1737 = vmatpush1.msra.mxu0 0.0
        %1738 = vmatprep.subr.mxu0 0.0
        %1739 = vmatpush1.msra.mxu0 0.0
        %1740 = vmatprep.subr.mxu0 0.0
        %1741 = vmatpush1.msra.mxu0 0.0
        %1742 = vmatprep.subr.mxu0 0.0
        %1743 = vmatpush1.msra.mxu0 0.0
        %1744 = vmatprep.subr.mxu0 0.0
        %1745 = vmatpush1.msra.mxu0 0.0
        %1746 = vmatprep.subr.mxu0 0.0
        %1747 = vmatpush1.msra.mxu0 0.0
        %1748 = vmatprep.subr.mxu0 0.0
        %1749 = vmatpush1.msra.mxu0 0.0
        %1750 = vmatprep.subr.mxu0 0.0
        %1751 = vmatpush1.msra.mxu0 0.0
        %1752 = vmatprep.subr.mxu0 0.0
        %1753 = vmatpush1.msra.mxu0 0.0
        %1754 = vmatprep.subr.mxu0 0.0
        %1755 = vmatpush1.msra.mxu0 0.0
        %1756 = vmatprep.subr.mxu0 0.0
        %1757 = vmatpush1.msra.mxu0 0.0
        %1758 = vmatprep.subr.mxu0 0.0
        %1759 = vmatpush1.msra.mxu0 0.0
        %1760 = vmatprep.subr.mxu0 0.0
        %1761 = vmatpush1.msra.mxu0 0.0
        %1762 = vmatprep.subr.mxu0 0.0
        %1763 = vmatpush1.msra.mxu0 0.0
        %1764 = vmatprep.subr.mxu0 0.0
        %1765 = vmatpush1.msra.mxu0 0.0
        %1766 = vmatprep.subr.mxu0 0.0
        %1767 = vmatpush1.msra.mxu0 0.0
        %1768 = vmatprep.subr.mxu0 0.0
        %1769 = vmatpush1.msra.mxu0 0.0
        %1770 = vmatprep.subr.mxu0 0.0
        %1771 = vmatpush1.msra.mxu0 0.0
        %1772 = vmatprep.subr.mxu0 0.0
        %1773 = vmatpush1.msra.mxu0 0.0
        %1774 = vmatprep.subr.mxu0 0.0
        %1775 = vmatpush1.msra.mxu0 0.0
        %1776 = vmatprep.subr.mxu0 0.0
        %1777 = vmatpush1.msra.mxu0 0.0
        %1778 = vmatprep.subr.mxu0 0.0
        %1779 = vmatpush1.msra.mxu0 0.0
        %1780 = vmatprep.subr.mxu0 0.0
        %1781 = vmatpush1.msra.mxu0 0.0
        %1782 = vmatprep.subr.mxu0 0.0
        %1783 = vmatpush1.msra.mxu0 0.0
        %1784 = vmatprep.subr.mxu0 0.0
        %1785 = vmatpush1.msra.mxu0 0.0
        %1786 = vmatprep.subr.mxu0 0.0
        %1787 = vmatpush1.msra.mxu0 0.0
        %1788 = vmatprep.mubr.f32.mxu0 0.0
        %1789 = vmatmul.mubr.f32.gmra.mrb[0].mxu0 %v939
        %v1790 = vpop.f32.mrb[0].mxu0
        %v1791 = vadd.f32 0.0, %v1790
        %v1792 = vpop.f32.mrb[0].mxu0
        %1793 = vdwg.mxu0
        %v1794 = vmul.f32 %v1791, %v1011
        %v1795 = vmul.f32 %v1723, %v1723
        %v1796 = vsub.f32 %v1794, %v1795
        %1797 = vmatprep.subr.mxu0 0.0
        %1798 = vmatpush1.msra.mxu0 %v1723
        %1799 = vmatprep.subr.mxu0 0.0
        %1800 = vmatpush1.msra.mxu0 0.0
        %1801 = vmatprep.subr.mxu0 0.0
        %1802 = vmatpush1.msra.mxu0 0.0
        %1803 = vmatprep.subr.mxu0 0.0
        %1804 = vmatpush1.msra.mxu0 0.0
        %1805 = vmatprep.subr.mxu0 0.0
        %1806 = vmatpush1.msra.mxu0 0.0
        %1807 = vmatprep.subr.mxu0 0.0
        %1808 = vmatpush1.msra.mxu0 0.0
        %1809 = vmatprep.subr.mxu0 0.0
        %1810 = vmatpush1.msra.mxu0 0.0
        %1811 = vmatprep.subr.mxu0 0.0
        %1812 = vmatpush1.msra.mxu0 0.0
        %1813 = vmatprep.subr.mxu0 0.0
        %1814 = vmatpush1.msra.mxu0 0.0
        %1815 = vmatprep.subr.mxu0 0.0
        %1816 = vmatpush1.msra.mxu0 0.0
        %1817 = vmatprep.subr.mxu0 0.0
        %1818 = vmatpush1.msra.mxu0 0.0
        %1819 = vmatprep.subr.mxu0 0.0
        %1820 = vmatpush1.msra.mxu0 0.0
        %1821 = vmatprep.subr.mxu0 0.0
        %1822 = vmatpush1.msra.mxu0 0.0
        %1823 = vmatprep.subr.mxu0 0.0
        %1824 = vmatpush1.msra.mxu0 0.0
        %1825 = vmatprep.subr.mxu0 0.0
        %1826 = vmatpush1.msra.mxu0 0.0
        %1827 = vmatprep.subr.mxu0 0.0
        %1828 = vmatpush1.msra.mxu0 0.0
        %1829 = vmatprep.subr.mxu0 0.0
        %1830 = vmatpush1.msra.mxu0 0.0
        %1831 = vmatprep.subr.mxu0 0.0
        %1832 = vmatpush1.msra.mxu0 0.0
        %1833 = vmatprep.subr.mxu0 0.0
        %1834 = vmatpush1.msra.mxu0 0.0
        %1835 = vmatprep.subr.mxu0 0.0
        %1836 = vmatpush1.msra.mxu0 0.0
        %1837 = vmatprep.subr.mxu0 0.0
        %1838 = vmatpush1.msra.mxu0 0.0
        %1839 = vmatprep.subr.mxu0 0.0
        %1840 = vmatpush1.msra.mxu0 0.0
        %1841 = vmatprep.subr.mxu0 0.0
        %1842 = vmatpush1.msra.mxu0 0.0
        %1843 = vmatprep.subr.mxu0 0.0
        %1844 = vmatpush1.msra.mxu0 0.0
        %1845 = vmatprep.subr.mxu0 0.0
        %1846 = vmatpush1.msra.mxu0 0.0
        %1847 = vmatprep.subr.mxu0 0.0
        %1848 = vmatpush1.msra.mxu0 0.0
        %1849 = vmatprep.subr.mxu0 0.0
        %1850 = vmatpush1.msra.mxu0 0.0
        %1851 = vmatprep.subr.mxu0 0.0
        %1852 = vmatpush1.msra.mxu0 0.0
        %1853 = vmatprep.subr.mxu0 0.0
        %1854 = vmatpush1.msra.mxu0 0.0
        %1855 = vmatprep.subr.mxu0 0.0
        %1856 = vmatpush1.msra.mxu0 0.0
        %1857 = vmatprep.subr.mxu0 0.0
        %1858 = vmatpush1.msra.mxu0 0.0
        %1859 = vmatprep.subr.mxu0 0.0
        %1860 = vmatpush1.msra.mxu0 0.0
        %1861 = vmatprep.mubr.f32.mxu0 0.0
        %1862 = vmatmul.mubr.f32.gmra.mrb[0].mxu0 %v1087
        %v1863 = vpop.f32.mrb[0].mxu0
        %v1864 = vadd.f32 0.0, %v1863
        %v1865 = vpop.f32.mrb[0].mxu0
        %1866 = vmatprep.mubr.f32.mxu0 0.0
        %1867 = vmatmul.mubr.f32.gmra.mrb[0].mxu0 %v1090
        %v1868 = vpop.f32.mrb[0].mxu0
        %v1869 = vadd.f32 0.0, %v1868
        %v1870 = vpop.f32.mrb[0].mxu0
        %1871 = vdwg.mxu0
        %1873 = vset.pattern.permute.xlu0 0
        %1874 = vperm.xlu0 %1873, %v1864
        %v1875 = vpop.permute.xlu0 %1874
        %1878 = vset.pattern.permute.xlu0 0
        %1879 = vperm.xlu0 %1878, %v1869
        %v1880 = vpop.permute.xlu0 %1879
        %v1882 = vsub.f32 %v1633, %v1875
        %v1883 = vsub.f32 %v1634, %v1880
        %1884 = vmatprep.subr.mxu0 0.0
        %1885 = vmatpush1.msra.mxu0 %v1796
        %1886 = vmatprep.subr.mxu0 0.0
        %1887 = vmatpush1.msra.mxu0 0.0
        %1888 = vmatprep.subr.mxu0 0.0
        %1889 = vmatpush1.msra.mxu0 0.0
        %1890 = vmatprep.subr.mxu0 0.0
        %1891 = vmatpush1.msra.mxu0 0.0
        %1892 = vmatprep.subr.mxu0 0.0
        %1893 = vmatpush1.msra.mxu0 0.0
        %1894 = vmatprep.subr.mxu0 0.0
        %1895 = vmatpush1.msra.mxu0 0.0
        %1896 = vmatprep.subr.mxu0 0.0
        %1897 = vmatpush1.msra.mxu0 0.0
        %1898 = vmatprep.subr.mxu0 0.0
        %1899 = vmatpush1.msra.mxu0 0.0
        %1900 = vmatprep.subr.mxu0 0.0
        %1901 = vmatpush1.msra.mxu0 0.0
        %1902 = vmatprep.subr.mxu0 0.0
        %1903 = vmatpush1.msra.mxu0 0.0
        %1904 = vmatprep.subr.mxu0 0.0
        %1905 = vmatpush1.msra.mxu0 0.0
        %1906 = vmatprep.subr.mxu0 0.0
        %1907 = vmatpush1.msra.mxu0 0.0
        %1908 = vmatprep.subr.mxu0 0.0
        %1909 = vmatpush1.msra.mxu0 0.0
        %1910 = vmatprep.subr.mxu0 0.0
        %1911 = vmatpush1.msra.mxu0 0.0
        %1912 = vmatprep.subr.mxu0 0.0
        %1913 = vmatpush1.msra.mxu0 0.0
        %1914 = vmatprep.subr.mxu0 0.0
        %1915 = vmatpush1.msra.mxu0 0.0
        %1916 = vmatprep.subr.mxu0 0.0
        %1917 = vmatpush1.msra.mxu0 0.0
        %1918 = vmatprep.subr.mxu0 0.0
        %1919 = vmatpush1.msra.mxu0 0.0
        %1920 = vmatprep.subr.mxu0 0.0
        %1921 = vmatpush1.msra.mxu0 0.0
        %1922 = vmatprep.subr.mxu0 0.0
        %1923 = vmatpush1.msra.mxu0 0.0
        %1924 = vmatprep.subr.mxu0 0.0
        %1925 = vmatpush1.msra.mxu0 0.0
        %1926 = vmatprep.subr.mxu0 0.0
        %1927 = vmatpush1.msra.mxu0 0.0
        %1928 = vmatprep.subr.mxu0 0.0
        %1929 = vmatpush1.msra.mxu0 0.0
        %1930 = vmatprep.subr.mxu0 0.0
        %1931 = vmatpush1.msra.mxu0 0.0
        %1932 = vmatprep.subr.mxu0 0.0
        %1933 = vmatpush1.msra.mxu0 0.0
        %1934 = vmatprep.subr.mxu0 0.0
        %1935 = vmatpush1.msra.mxu0 0.0
        %1936 = vmatprep.subr.mxu0 0.0
        %1937 = vmatpush1.msra.mxu0 0.0
        %1938 = vmatprep.subr.mxu0 0.0
        %1939 = vmatpush1.msra.mxu0 0.0
        %1940 = vmatprep.subr.mxu0 0.0
        %1941 = vmatpush1.msra.mxu0 0.0
        %1942 = vmatprep.subr.mxu0 0.0
        %1943 = vmatpush1.msra.mxu0 0.0
        %1944 = vmatprep.subr.mxu0 0.0
        %1945 = vmatpush1.msra.mxu0 0.0
        %1946 = vmatprep.subr.mxu0 0.0
        %1947 = vmatpush1.msra.mxu0 0.0
        %1948 = vmatprep.mubr.f32.mxu0 0.0
        %1949 = vmatmul.mubr.f32.gmra.mrb[0].mxu0 %v1087
        %v1950 = vpop.f32.mrb[0].mxu0
        %v1951 = vadd.f32 1e-05, %v1950
        %v1952 = vpop.f32.mrb[0].mxu0
        %1953 = vmatprep.mubr.f32.mxu0 0.0
        %1954 = vmatmul.mubr.f32.gmra.mrb[0].mxu0 %v1090
        %v1955 = vpop.f32.mrb[0].mxu0
        %v1956 = vadd.f32 1e-05, %v1955
        %v1957 = vpop.f32.mrb[0].mxu0
        %1958 = vdwg.mxu0
        %v1959 = vrsqrt.pop %v1951
        %v1960 = vrsqrt.pop %v1956
        %1962 = vset.pattern.permute.xlu0 0
        %1963 = vperm.xlu0 %1962, %v1959
        %v1964 = vpop.permute.xlu0 %1963
        %1967 = vset.pattern.permute.xlu0 0
        %1968 = vperm.xlu0 %1967, %v1960
        %v1969 = vpop.permute.xlu0 %1968
        %v1971 = vmul.f32 %v1882, %v1964
        %v1972 = vmul.f32 %v1883, %v1969
        %1974 = vset.pattern.permute.xlu0 0
        %1975 = vperm.xlu0 %1974, %v1635
        %v1976 = vpop.permute.xlu0 %1975
        %1979 = vset.pattern.permute.xlu0 0
        %1980 = vperm.xlu0 %1979, %v1636
        %v1981 = vpop.permute.xlu0 %1980
        %v1983 = vmul.f32 %v1971, %v1976
        %v1984 = vmul.f32 %v1972, %v1981
        %1986 = vset.pattern.permute.xlu0 0
        %1987 = vperm.xlu0 %1986, %v1637
        %v1988 = vpop.permute.xlu0 %1987
        %1991 = vset.pattern.permute.xlu0 0
        %1992 = vperm.xlu0 %1991, %v1638
        %v1993 = vpop.permute.xlu0 %1992
        %v1995 = vadd.f32 %v1983, %v1988
        %v1996 = vadd.f32 %v1984, %v1993
        %v1997 = vmax.f32 %v1995, 0.0
        %v1998 = vmax.f32 %v1996, 0.0
        %v1999 = vand.u32 2147483647, %v1995
        %v2000 = vand.u32 2147483647, %v1996
        %v2001 = vsub.f32 0.0, %v1999
        %v2002 = vsub.f32 0.0, %v2000
        %v2003 = vmul.f32 %v2001, 1.442695
        %v2004 = vpow.pop %v2003
        %v2005 = vmul.f32 %v2002, 1.442695
        %v2006 = vpow.pop %v2005
        %v2007 = vadd.f32 %v2004, 1.0
        %v2008 = vadd.f32 %v2006, 1.0
        %v2009 = vlog2.pop %v2007
        %v2010 = vmul.f32 %v2009, 0.6931472
        %v2011 = vlog2.pop %v2008
        %v2012 = vmul.f32 %v2011, 0.6931472
        %v2013 = vadd.f32 %v1997, %v2010
        %v2014 = vadd.f32 %v1998, %v2012
        %v2015 = vtanh.pop %v2013
        %v2016 = vtanh.pop %v2014
        %v2017 = vmul.f32 %v1995, %v2015
        %v2018 = vmul.f32 %v1996, %v2016
        %v2019 = vld [vmem:[%s12] sm:$0xff]
        %v2020 = vld [vmem:[%s12 + $0x8] sm:$0xff]
        %v2021 = vld [vmem:[%s13] sm:$0xff]
        %v2022 = vld [vmem:[%s13 + $0x8] sm:$0xff]
        %2024 = vset.pattern.permute.xlu0 0
        %2025 = vperm.xlu0 %2024, %v2021
        %v2026 = vpop.permute.xlu0 %2025
        %2029 = vset.pattern.permute.xlu0 0
        %2030 = vperm.xlu0 %2029, %v2022
        %v2031 = vpop.permute.xlu0 %2030
        %v2034 = vsel %vm627, %v2019, 0
        %v2037 = vsel %vm627, %v2020, 0
        %2039 = vmatprep.subr.mxu0 0.0
        %2040 = vmatpush1.msra.mxu0 %v625
        %2041 = vmatprep.subr.mxu0 0.0
        %2042 = vmatpush1.msra.mxu0 0.0
        %2043 = vmatprep.subr.mxu0 0.0
        %2044 = vmatpush1.msra.mxu0 0.0
        %2045 = vmatprep.subr.mxu0 0.0
        %2046 = vmatpush1.msra.mxu0 0.0
        %2047 = vmatprep.subr.mxu0 0.0
        %2048 = vmatpush1.msra.mxu0 0.0
        %2049 = vmatprep.subr.mxu0 0.0
        %2050 = vmatpush1.msra.mxu0 0.0
        %2051 = vmatprep.subr.mxu0 0.0
        %2052 = vmatpush1.msra.mxu0 0.0
        %2053 = vmatprep.subr.mxu0 0.0
        %2054 = vmatpush1.msra.mxu0 0.0
        %2055 = vmatprep.subr.mxu0 0.0
        %2056 = vmatpush1.msra.mxu0 0.0
        %2057 = vmatprep.subr.mxu0 0.0
        %2058 = vmatpush1.msra.mxu0 0.0
        %2059 = vmatprep.subr.mxu0 0.0
        %2060 = vmatpush1.msra.mxu0 0.0
        %2061 = vmatprep.subr.mxu0 0.0
        %2062 = vmatpush1.msra.mxu0 0.0
        %2063 = vmatprep.subr.mxu0 0.0
        %2064 = vmatpush1.msra.mxu0 0.0
        %2065 = vmatprep.subr.mxu0 0.0
        %2066 = vmatpush1.msra.mxu0 0.0
        %2067 = vmatprep.subr.mxu0 0.0
        %2068 = vmatpush1.msra.mxu0 0.0
        %2069 = vmatprep.subr.mxu0 0.0
        %2070 = vmatpush1.msra.mxu0 0.0
        %2071 = vmatprep.subr.mxu0 0.0
        %2072 = vmatpush1.msra.mxu0 0.0
        %2073 = vmatprep.subr.mxu0 0.0
        %2074 = vmatpush1.msra.mxu0 0.0
        %2075 = vmatprep.subr.mxu0 0.0
        %2076 = vmatpush1.msra.mxu0 0.0
        %2077 = vmatprep.subr.mxu0 0.0
        %2078 = vmatpush1.msra.mxu0 0.0
        %2079 = vmatprep.subr.mxu0 0.0
        %2080 = vmatpush1.msra.mxu0 0.0
        %2081 = vmatprep.subr.mxu0 0.0
        %2082 = vmatpush1.msra.mxu0 0.0
        %2083 = vmatprep.subr.mxu0 0.0
        %2084 = vmatpush1.msra.mxu0 0.0
        %2085 = vmatprep.subr.mxu0 0.0
        %2086 = vmatpush1.msra.mxu0 0.0
        %2087 = vmatprep.subr.mxu0 0.0
        %2088 = vmatpush1.msra.mxu0 0.0
        %2089 = vmatprep.subr.mxu0 0.0
        %2090 = vmatpush1.msra.mxu0 0.0
        %2091 = vmatprep.subr.mxu0 0.0
        %2092 = vmatpush1.msra.mxu0 0.0
        %2093 = vmatprep.subr.mxu0 0.0
        %2094 = vmatpush1.msra.mxu0 0.0
        %2095 = vmatprep.subr.mxu0 0.0
        %2096 = vmatpush1.msra.mxu0 0.0
        %2097 = vmatprep.subr.mxu0 0.0
        %2098 = vmatpush1.msra.mxu0 0.0
        %2099 = vmatprep.subr.mxu0 0.0
        %2100 = vmatpush1.msra.mxu0 0.0
        %2101 = vmatprep.subr.mxu0 0.0
        %2102 = vmatpush1.msra.mxu0 0.0
        %2103 = vmatprep.mubr.f32.mxu0 0.0
        %2104 = vmatmul.mubr.f32.gmra.mrb[0].mxu0 %v2034
        %v2105 = vpop.f32.mrb[0].mxu0
        %v2106 = vadd.f32 %v2026, %v2105
        %v2107 = vpop.f32.mrb[0].mxu0
        %2108 = vmatprep.mubr.f32.mxu0 0.0
        %2109 = vmatmul.mubr.f32.gmra.mrb[0].mxu0 %v2037
        %v2110 = vpop.f32.mrb[0].mxu0
        %v2111 = vadd.f32 %v2031, %v2110
        %v2112 = vpop.f32.mrb[0].mxu0
        %2113 = vdwg.mxu0
        %v2114 = vadd.f32 %v2017, %v2106
        %v2115 = vadd.f32 %v2018, %v2111
        %2116 = vst.msk [vmem:[%s473] sm:$0xff] %vm923, %v2114
        %2117 = vst.msk [vmem:[%s473 + $0x8] sm:$0xff] %vm923, %v2115
        %s2118 = sand.u32 %s340, 1
        %s2119 = scalar_lea.sflag [#allocation4], %s2118
        %s2120 = sand.u32 %s340, 1
        %s2121 = smul.addr %s2120, 16
        %s2122 = scalar_lea.vmem [#allocation3], %s2121
        // Predicated region
        $region77: #{tpu_custom_call.1} parent=75 // pred_check
          %p2123 = pneg %p350
        $region78: #{tpu_custom_call.1} parent=75 // pred_check_branch
          %2125 = sbr.rel (%p2123) target = $region80
        $region79: #{tpu_custom_call.1} parent=75 // pred_region
          %s2127 = ssub.s32 256, 256
          %2128 = vsyncadd %s2119, %s2127
          %s2129 = smul.addr %s28, 2
          %s2130 = smul.addr %s2129, 128
          %s2131 = scalar_lea.hbm %s14, %s2130
          %s2132 = sshll.u32 %s2122, 4
          %s2133 = int_to_ptr.vmem [resolvable:$true] %s2132
          %2138 = dma.vmem_to_hbm [thread:$0]  %s2133, 256, %s2131, %s2119, 128, 128, 8
        $region80: #{tpu_custom_call.1} parent=75 // pred_fallthru
          _
      $region76: #{tpu_custom_call.1} parent=5 // pred_fallthru
        _
      %p2139 = scmp.le.s32.totalorder 2, %s23
      // Predicated region
      $region81: #{tpu_custom_call.1} parent=5 // pred_check
        %p2140 = pneg %p2139
      $region82: #{tpu_custom_call.1} parent=5 // pred_check_branch
        %2142 = sbr.rel (%p2140) target = $region84
      $region83: #{tpu_custom_call.1} parent=5 // pred_region
        %s2143 = ssub.s32 %s23, 2
        // Predicated region
        $region85: #{tpu_custom_call.1} parent=83 // pred_check
          %p2144 = pneg %p356
        $region86: #{tpu_custom_call.1} parent=83 // pred_check_branch
          %2146 = sbr.rel (%p2144) target = $region88
        $region87: #{tpu_custom_call.1} parent=83 // pred_region
          %s2147 = sand.u32 %s341, 1
          %s2148 = scalar_lea.sflag [#allocation4], %s2147
          %s2149 = sand.u32 %s341, 1
          %s2150 = smul.addr %s2149, 16
          %s2151 = scalar_lea.vmem [#allocation3], %s2150
          %2152 = dma.done %s2148, 256
        $region88: #{tpu_custom_call.1} parent=83 // pred_fallthru
          _
      $region84: #{tpu_custom_call.1} parent=5 // pred_fallthru
        _
    $region6: #{tpu_custom_call.1} parent=1 // loop_footer
      %s27 = sadd.s32 1, %s23
    $region7: #{tpu_custom_call.1} parent=1 // loop_footer_branch
      %22 = sbr.rel target = $region3
    $region8: #{tpu_custom_call.1} parent=1 // loop_exit
      _
    %2153 = vsyncpa [#allocation4], 1
    %s2154 = scalar_lea.sflag [#allocation4], 1
    %2155 = vsyncpa %s2154, 1

</llo_original>
